<compile_context>
chip_gen: v5e
topology: v5e:2x2
jax: 0.10.0
libtpu: 0.0.40
codegen_flags: <defaults>
</compile_context>

<pallas_src>
import functools

import jax
import jax.numpy as jnp
from jax.experimental import pallas as pl
from jax.experimental.pallas import tpu as pltpu

EPS = 1e-5                      # PyTorch BatchNorm2d default
MXU_DTYPE = jnp.bfloat16        # bf16 MXU inputs; f32 accumulation


def _default_vmem_limit_bytes():
    """Half of physical VMEM (64 MiB on v5e/v6e, 32 MiB on v7x)."""
    try:
        cap = int(pltpu.get_tpu_info().vmem_capacity_bytes)
        return int(min(max(cap // 2, 32 * 1024 * 1024), 64 * 1024 * 1024))
    except Exception:
        return 32 * 1024 * 1024


VMEM_LIMIT_BYTES = _default_vmem_limit_bytes()


def _dense_block_kernel(x_ref, s1_ref, b1_ref, w1_ref, b2_ref, w2_ref, out_ref,
                        *, L, HW, W, c0, cbn, G, ctot_pad, pad_rows):
    """Fused _DenseBlock (all L layers) for one image.

    x_ref:   (1, HW, c0)            initial features
    s1_ref:  (L, 1, ctot_pad)       folded BN1 scale (zero-padded past cin_l)
    b1_ref:  (L, 1, ctot_pad)       folded BN1 bias
    w1_ref:  (L, ctot_pad, cbn)     bf16 conv1x1 with BN2 scale folded in
                                    (rows past cin_l are zero)
    b2_ref:  (L, 1, cbn)            folded BN2 bias
    w2_ref:  (L, 9*cbn, G)          bf16 conv3x3, K flattened as (dy, dx, c)
    out_ref: (1, HW, ctot_pad)      full-width feature slab (resident in VMEM
                                    for the whole block; written to HBM once)
    """
    # ---- initialize the resident slab: init features + zero tail ------------
    out_ref[0, :, :c0] = x_ref[0]
    out_ref[0, :, c0:] = jnp.zeros((HW, ctot_pad - c0), jnp.float32)

    # ---- column-boundary masks for the 3x3 conv (f32: native on v5e VPU) ----
    col = jax.lax.broadcasted_iota(jnp.int32, (HW, 1), 0) % W
    onef = jnp.ones((HW, 1), jnp.float32)
    zerof = jnp.zeros((HW, 1), jnp.float32)
    mask_l = jnp.where(col >= 1, onef, zerof)       # valid when source col = w-1
    mask_r = jnp.where(col <= W - 2, onef, zerof)   # valid when source col = w+1

    zpad = jnp.zeros((pad_rows, cbn), jnp.float32)

    for l in range(L):  # static unrolled layer loop
        cin = c0 + l * G

        # --- BN1 + ReLU (VPU, f32, full lane width; padded channels are zero
        #     and their w1 rows are zero, so they contribute nothing) ---------
        x_full = out_ref[0]                                   # (HW, ctot_pad)
        a1 = jnp.maximum(x_full * s1_ref[l] + b1_ref[l], 0.0)

        # --- conv1x1 (MXU, BN2 scale folded into w1) + BN2 bias + ReLU -------
        bott = jnp.dot(a1.astype(MXU_DTYPE), w1_ref[l],
                       preferred_element_type=jnp.float32)    # (HW, cbn)
        act2 = jnp.maximum(bott + b2_ref[l], 0.0)             # f32

        # --- conv3x3, padding=1, as ONE matmul with K = 9*cbn ----------------
        # Zero-extend flattened rows so every (dy, dx) shift is a plain row
        # slice; columns wrapping across a row boundary are masked (f32).
        az = jnp.concatenate([zpad, act2, zpad], axis=0)      # (HW+2*pad, cbn)
        pieces = []
        for dy in range(3):
            for dx in range(3):
                start = (dy - 1) * W + (dx - 1) + pad_rows
                piece = az[start:start + HW, :]
                if dx == 0:
                    piece = piece * mask_l
                elif dx == 2:
                    piece = piece * mask_r
                pieces.append(piece)
        lhs = jnp.concatenate(pieces, axis=-1).astype(MXU_DTYPE)  # (HW, 9*cbn)
        new = jnp.dot(lhs, w2_ref[l],
                      preferred_element_type=jnp.float32)     # (HW, G)

        # --- partial lane store of the new growth-wide slab ------------------
        out_ref[0, :, cin:cin + G] = new


def dense_block_forward(x_nchw, params, growth_rate, bn_size):
    """_DenseBlock.forward: returns concat([x, new_1, ..., new_L], channel)."""
    x = jnp.transpose(x_nchw, (0, 2, 3, 1)).astype(jnp.float32)  # NCHW -> NHWC
    N, H, W, c0 = x.shape
    L = len(params)
    G = growth_rate
    cbn = bn_size * growth_rate
    HW = H * W
    ctot = c0 + L * G
    ctot_pad = max(((ctot + 127) // 128) * 128, 128)   # lane-dense slab width
    pad_rows = ((W + 1 + 7) // 8) * 8                  # >= W+1, sublane-aligned

    # ---- fold eval-mode BatchNorm, stack & zero-pad per-layer weights -------
    s1_list, b1_list, w1_list, b2_list, w2_list = [], [], [], [], []
    cin = c0
    for p in params:
        s1 = p["bn1_gamma"] / jnp.sqrt(p["bn1_var"] + EPS)
        b1 = p["bn1_beta"] - p["bn1_mean"] * s1
        s2 = p["bn2_gamma"] / jnp.sqrt(p["bn2_var"] + EPS)
        b2 = p["bn2_beta"] - p["bn2_mean"] * s2
        w1f = p["w1"] * s2[None, :]                       # fold BN2 scale
        s1_list.append(jnp.pad(s1, (0, ctot_pad - cin)))
        b1_list.append(jnp.pad(b1, (0, ctot_pad - cin)))
        w1_list.append(jnp.pad(w1f, ((0, ctot_pad - cin), (0, 0))))
        b2_list.append(b2)
        w2_list.append(p["w2"].reshape(9 * cbn, G))       # K = (dy, dx, c)
        cin += G

    s1_all = jnp.stack(s1_list)[:, None, :]                       # (L,1,ctot_pad)
    b1_all = jnp.stack(b1_list)[:, None, :]
    w1_all = jnp.stack(w1_list).astype(MXU_DTYPE)                 # (L,ctot_pad,cbn)
    b2_all = jnp.stack(b2_list)[:, None, :]                       # (L,1,cbn)
    w2_all = jnp.stack(w2_list).astype(MXU_DTYPE)                 # (L,9*cbn,G)

    kernel = functools.partial(
        _dense_block_kernel, L=L, HW=HW, W=W, c0=c0, cbn=cbn, G=G,
        ctot_pad=ctot_pad, pad_rows=pad_rows)

    # TODO(synk): for N==1 on v7x, a second (spatial) parallel grid axis with a
    # 1-row halo would be needed to occupy both TensorCores; not implemented.
    out = pl.pallas_call(
        kernel,
        out_shape=jax.ShapeDtypeStruct((N, HW, ctot_pad), jnp.float32),
        grid=(N,),
        in_specs=[
            pl.BlockSpec((1, HW, c0), lambda n: (n, 0, 0)),            # x
            pl.BlockSpec((L, 1, ctot_pad), lambda n: (0, 0, 0)),       # s1
            pl.BlockSpec((L, 1, ctot_pad), lambda n: (0, 0, 0)),       # b1
            pl.BlockSpec((L, ctot_pad, cbn), lambda n: (0, 0, 0)),     # w1
            pl.BlockSpec((L, 1, cbn), lambda n: (0, 0, 0)),            # b2
            pl.BlockSpec((L, 9 * cbn, G), lambda n: (0, 0, 0)),        # w2
        ],
        out_specs=pl.BlockSpec((1, HW, ctot_pad), lambda n: (n, 0, 0)),
        compiler_params=pltpu.CompilerParams(
            dimension_semantics=("parallel",),     # batch across cores (v7x)
            vmem_limit_bytes=VMEM_LIMIT_BYTES),
    )(x.reshape(N, HW, c0), s1_all, b1_all, w1_all, b2_all, w2_all)

    out = out[:, :, :ctot].reshape(N, H, W, ctot)
    return jnp.transpose(out, (0, 3, 1, 2))  # NHWC -> NCHW


def make_dense_block_params(key, num_layers, num_input_features, bn_size,
                            growth_rate):
    """Deterministic synthetic parameters matching _DenseLayer shapes."""
    params = []
    cin = num_input_features
    cbn = bn_size * growth_rate
    for i in range(num_layers):
        ks = jax.random.split(jax.random.fold_in(key, i), 10)
        p = {
            "bn1_gamma": jax.random.uniform(ks[0], (cin,), jnp.float32, 0.5, 1.5),
            "bn1_beta": 0.1 * jax.random.normal(ks[1], (cin,), jnp.float32),
            "bn1_mean": 0.1 * jax.random.normal(ks[2], (cin,), jnp.float32),
            "bn1_var": jax.random.uniform(ks[3], (cin,), jnp.float32, 0.5, 1.5),
            # conv1: (Cin -> bn_size*growth), kernel_size=1, no bias
            "w1": jax.random.normal(ks[4], (cin, cbn), jnp.float32)
                  * (1.0 / jnp.sqrt(cin)),
            "bn2_gamma": jax.random.uniform(ks[5], (cbn,), jnp.float32, 0.5, 1.5),
            "bn2_beta": 0.1 * jax.random.normal(ks[6], (cbn,), jnp.float32),
            "bn2_mean": 0.1 * jax.random.normal(ks[7], (cbn,), jnp.float32),
            "bn2_var": jax.random.uniform(ks[8], (cbn,), jnp.float32, 0.5, 1.5),
            # conv2: (bn_size*growth -> growth), kernel_size=3, padding=1, no bias
            "w2": jax.random.normal(ks[9], (3, 3, cbn, growth_rate), jnp.float32)
                  * (1.0 / jnp.sqrt(9.0 * cbn)),
        }
        params.append(p)
        cin += growth_rate
    return params


def _reference_dense_block(x_nchw, params, growth_rate, bn_size):
    """Pure-JAX (XLA) reference with the same eval-mode semantics."""
    x = jnp.transpose(x_nchw, (0, 2, 3, 1)).astype(jnp.float32)
    feats = [x]
    for p in params:
        cat = jnp.concatenate(feats, axis=-1)
        s1 = p["bn1_gamma"] / jnp.sqrt(p["bn1_var"] + EPS)
        b1 = p["bn1_beta"] - p["bn1_mean"] * s1
        a1 = jnp.maximum(cat * s1 + b1, 0.0)
        bott = jnp.einsum("nhwc,cd->nhwd", a1, p["w1"])
        s2 = p["bn2_gamma"] / jnp.sqrt(p["bn2_var"] + EPS)
        b2 = p["bn2_beta"] - p["bn2_mean"] * s2
        a2 = jnp.maximum(bott * s2 + b2, 0.0)
        new = jax.lax.conv_general_dilated(
            a2, p["w2"], window_strides=(1, 1), padding=((1, 1), (1, 1)),
            dimension_numbers=("NHWC", "HWIO", "NHWC"))
        feats.append(new)
    out = jnp.concatenate(feats, axis=-1)
    return jnp.transpose(out, (0, 3, 1, 2))


if __name__ == "__main__":
    # Small config: _DenseBlock(num_layers=3, num_input_features=16,
    #                           bn_size=2, growth_rate=8, drop_rate=0)
    num_layers = 3
    num_input_features = 16
    bn_size = 2
    growth_rate = 8
    N, H, W = 2, 8, 8

    key = jax.random.PRNGKey(0)
    k_x, k_p = jax.random.split(key)
    x = jax.random.normal(k_x, (N, num_input_features, H, W), jnp.float32)
    params = make_dense_block_params(k_p, num_layers, num_input_features,
                                     bn_size, growth_rate)

    # TODO(synk): dropout (drop_rate > 0, training mode) not implemented; this
    # block uses drop_rate=0 / eval semantics, so F.dropout is the identity.
    fwd = jax.jit(functools.partial(dense_block_forward,
                                    growth_rate=growth_rate, bn_size=bn_size))
    out = jax.block_until_ready(fwd(x, params))

    expected_channels = num_input_features + num_layers * growth_rate
    assert out.shape == (N, expected_channels, H, W), out.shape
    assert bool(jnp.all(jnp.isfinite(out)))

    ref = _reference_dense_block(x, params, growth_rate, bn_size)
    max_err = float(jnp.max(jnp.abs(out - ref)))
    assert max_err < 1e-1, f"max abs error vs reference: {max_err}"

    print("KERNEL_OK")
</pallas_src>

<mosaic_0001>
module attributes {stable_mosaic.version = 11 : i64} {
  func.func @_dense_block_kernel(%arg0: i32, %arg1: memref<1x64x16xf32, #tpu.memory_space<vmem>>, %arg2: memref<3x1x128xf32, #tpu.memory_space<vmem>>, %arg3: memref<3x1x128xf32, #tpu.memory_space<vmem>>, %arg4: memref<3x128x16xbf16, #tpu.memory_space<vmem>>, %arg5: memref<3x1x16xf32, #tpu.memory_space<vmem>>, %arg6: memref<3x144x8xbf16, #tpu.memory_space<vmem>>, %arg7: memref<1x64x128xf32, #tpu.memory_space<vmem>>) attributes {dimension_semantics = [#tpu.dimension_semantics<parallel>], iteration_bounds = array<i64: 2>, scalar_prefetch = 0 : i64, scratch_operands = 0 : i64, tpu.core_type = #tpu.core_type<tc>, window_params = [{transform_indices = @transform_0, window_bounds = array<i64: 1, 64, 16>}, {pipeline_mode = #tpu.pipeline_mode<synchronous>, transform_indices = @transform_1, window_bounds = array<i64: 3, 1, 128>}, {pipeline_mode = #tpu.pipeline_mode<synchronous>, transform_indices = @transform_2, window_bounds = array<i64: 3, 1, 128>}, {pipeline_mode = #tpu.pipeline_mode<synchronous>, transform_indices = @transform_3, window_bounds = array<i64: 3, 128, 16>}, {pipeline_mode = #tpu.pipeline_mode<synchronous>, transform_indices = @transform_4, window_bounds = array<i64: 3, 1, 16>}, {pipeline_mode = #tpu.pipeline_mode<synchronous>, transform_indices = @transform_5, window_bounds = array<i64: 3, 144, 8>}, {transform_indices = @transform_6, window_bounds = array<i64: 1, 64, 128>}]} {
    %c0 = arith.constant 0 : index
    %c0_0 = arith.constant 0 : index
    %c0_1 = arith.constant 0 : index
    %0 = vector.load %arg1[%c0, %c0_0, %c0_1] : memref<1x64x16xf32, #tpu.memory_space<vmem>>, vector<1x64x16xf32>
    %1 = vector.shape_cast %0 : vector<1x64x16xf32> to vector<64x16xf32>
    %c0_2 = arith.constant 0 : index
    %c0_3 = arith.constant 0 : index
    %c0_4 = arith.constant 0 : index
    %2 = vector.load %arg7[%c0_2, %c0_3, %c0_4] : memref<1x64x128xf32, #tpu.memory_space<vmem>>, vector<1x64x16xf32>
    %3 = vector.shape_cast %2 : vector<1x64x16xf32> to vector<64x16xf32>
    %4 = vector.shape_cast %1 : vector<64x16xf32> to vector<1x64x16xf32>
    tpu.vector_store %arg7[%c0_2, %c0_3, %c0_4], %4 {strides = array<i32>} : memref<1x64x128xf32, #tpu.memory_space<vmem>>, vector<1x64x16xf32>,
    %cst = arith.constant 0.000000e+00 : f32
    %5 = vector.broadcast %cst : f32 to vector<64x112xf32>
    %c0_5 = arith.constant 0 : index
    %c0_6 = arith.constant 0 : index
    %c16 = arith.constant 16 : index
    %6 = vector.load %arg7[%c0_5, %c0_6, %c16] : memref<1x64x128xf32, #tpu.memory_space<vmem>>, vector<1x64x112xf32>
    %7 = vector.shape_cast %6 : vector<1x64x112xf32> to vector<64x112xf32>
    %8 = vector.shape_cast %5 : vector<64x112xf32> to vector<1x64x112xf32>
    tpu.vector_store %arg7[%c0_5, %c0_6, %c16], %8 {strides = array<i32>} : memref<1x64x128xf32, #tpu.memory_space<vmem>>, vector<1x64x112xf32>,
    %9 = tpu.iota {dimensions = array<i32: 0>} : vector<64x1xi32>
    %c8_i32 = arith.constant 8 : i32
    %c0_i32 = arith.constant 0 : i32
    %10 = arith.cmpi eq, %c8_i32, %c0_i32 : i32
    %c1_i32 = arith.constant 1 : i32
    %11 = arith.select %10, %c1_i32, %c8_i32 : i32
    %12 = vector.broadcast %11 : i32 to vector<64x1xi32>
    %13 = arith.remsi %9, %12 : vector<64x1xi32>
    %c0_i32_7 = arith.constant 0 : i32
    %14 = vector.broadcast %c0_i32_7 : i32 to vector<64x1xi32>
    %15 = arith.cmpi ne, %13, %14 : vector<64x1xi32>
    %c0_i32_8 = arith.constant 0 : i32
    %16 = vector.broadcast %c0_i32_8 : i32 to vector<64x1xi32>
    %17 = arith.cmpi slt, %13, %16 : vector<64x1xi32>
    %c0_i32_9 = arith.constant 0 : i32
    %18 = arith.cmpi slt, %11, %c0_i32_9 : i32
    %19 = vector.broadcast %18 : i1 to vector<64x1xi1>
    %20 = vector.broadcast %19 : vector<64x1xi1> to vector<64x1xi1>
    %21 = arith.xori %17, %20 : vector<64x1xi1>
    %22 = arith.andi %21, %15 : vector<64x1xi1>
    %23 = vector.broadcast %11 : i32 to vector<64x1xi32>
    %24 = arith.addi %13, %23 : vector<64x1xi32>
    %25 = arith.select %22, %24, %13 : vector<64x1xi1>, vector<64x1xi32>
    %cst_10 = arith.constant 1.000000e+00 : f32
    %26 = vector.broadcast %cst_10 : f32 to vector<64x1xf32>
    %cst_11 = arith.constant 0.000000e+00 : f32
    %27 = vector.broadcast %cst_11 : f32 to vector<64x1xf32>
    %c1_i32_12 = arith.constant 1 : i32
    %28 = vector.broadcast %c1_i32_12 : i32 to vector<64x1xi32>
    %29 = arith.cmpi sge, %25, %28 : vector<64x1xi32>
    %30 = arith.select %29, %26, %27 : vector<64x1xi1>, vector<64x1xf32>
    %c6_i32 = arith.constant 6 : i32
    %31 = vector.broadcast %c6_i32 : i32 to vector<64x1xi32>
    %32 = arith.cmpi sle, %25, %31 : vector<64x1xi32>
    %33 = arith.select %32, %26, %27 : vector<64x1xi1>, vector<64x1xf32>
    %cst_13 = arith.constant 0.000000e+00 : f32
    %34 = vector.broadcast %cst_13 : f32 to vector<16x16xf32>
    %c0_14 = arith.constant 0 : index
    %c0_15 = arith.constant 0 : index
    %c0_16 = arith.constant 0 : index
    %35 = vector.load %arg7[%c0_14, %c0_15, %c0_16] : memref<1x64x128xf32, #tpu.memory_space<vmem>>, vector<1x64x128xf32>
    %36 = vector.shape_cast %35 : vector<1x64x128xf32> to vector<64x128xf32>
    %c0_17 = arith.constant 0 : index
    %c0_18 = arith.constant 0 : index
    %c0_19 = arith.constant 0 : index
    %37 = vector.load %arg2[%c0_17, %c0_18, %c0_19] : memref<3x1x128xf32, #tpu.memory_space<vmem>>, vector<1x1x128xf32>
    %38 = vector.shape_cast %37 : vector<1x1x128xf32> to vector<1x128xf32>
    %39 = vector.broadcast %38 : vector<1x128xf32> to vector<64x128xf32>
    %40 = arith.mulf %36, %39 : vector<64x128xf32>
    %c0_20 = arith.constant 0 : index
    %c0_21 = arith.constant 0 : index
    %c0_22 = arith.constant 0 : index
    %41 = vector.load %arg3[%c0_20, %c0_21, %c0_22] : memref<3x1x128xf32, #tpu.memory_space<vmem>>, vector<1x1x128xf32>
    %42 = vector.shape_cast %41 : vector<1x1x128xf32> to vector<1x128xf32>
    %43 = vector.broadcast %42 : vector<1x128xf32> to vector<64x128xf32>
    %44 = arith.addf %40, %43 : vector<64x128xf32>
    %cst_23 = arith.constant 0.000000e+00 : f32
    %45 = vector.broadcast %cst_23 : f32 to vector<64x128xf32>
    %46 = arith.maximumf %44, %45 : vector<64x128xf32>
    %47 = arith.truncf %46 : vector<64x128xf32> to vector<64x128xbf16>
    %c0_24 = arith.constant 0 : index
    %c0_25 = arith.constant 0 : index
    %c0_26 = arith.constant 0 : index
    %48 = vector.load %arg4[%c0_24, %c0_25, %c0_26] : memref<3x128x16xbf16, #tpu.memory_space<vmem>>, vector<1x128x16xbf16>
    %49 = vector.shape_cast %48 : vector<1x128x16xbf16> to vector<128x16xbf16>
    %cst_27 = arith.constant dense<0.000000e+00> : vector<64x16xf32>
    %50 = tpu.matmul %47, %49, %cst_27 {dimension_numbers = #tpu.dot_dimension_numbers<[1], [0], [0], [1], [0, 0, 1, 1], [], []>} : vector<64x128xbf16>, vector<128x16xbf16>, vector<64x16xf32> -> vector<64x16xf32>
    %c0_28 = arith.constant 0 : index
    %c0_29 = arith.constant 0 : index
    %c0_30 = arith.constant 0 : index
    %51 = vector.load %arg5[%c0_28, %c0_29, %c0_30] : memref<3x1x16xf32, #tpu.memory_space<vmem>>, vector<1x1x16xf32>
    %52 = vector.shape_cast %51 : vector<1x1x16xf32> to vector<1x16xf32>
    %53 = vector.broadcast %52 : vector<1x16xf32> to vector<64x16xf32>
    %54 = arith.addf %50, %53 : vector<64x16xf32>
    %cst_31 = arith.constant 0.000000e+00 : f32
    %55 = vector.broadcast %cst_31 : f32 to vector<64x16xf32>
    %56 = arith.maximumf %54, %55 : vector<64x16xf32>
    %57 = tpu.concatenate %34, %56, %34 in 0 : vector<16x16xf32>, vector<64x16xf32>, vector<16x16xf32> -> vector<96x16xf32>
    %58 = vector.extract_strided_slice %57 {offsets = [7, 0], sizes = [64, 16], strides = [1, 1]} : vector<96x16xf32> to vector<64x16xf32>
    %59 = vector.broadcast %30 : vector<64x1xf32> to vector<64x16xf32>
    %60 = arith.mulf %58, %59 : vector<64x16xf32>
    %61 = vector.extract_strided_slice %57 {offsets = [8, 0], sizes = [64, 16], strides = [1, 1]} : vector<96x16xf32> to vector<64x16xf32>
    %62 = vector.extract_strided_slice %57 {offsets = [9, 0], sizes = [64, 16], strides = [1, 1]} : vector<96x16xf32> to vector<64x16xf32>
    %63 = vector.broadcast %33 : vector<64x1xf32> to vector<64x16xf32>
    %64 = arith.mulf %62, %63 : vector<64x16xf32>
    %65 = vector.extract_strided_slice %57 {offsets = [15, 0], sizes = [64, 16], strides = [1, 1]} : vector<96x16xf32> to vector<64x16xf32>
    %66 = vector.broadcast %30 : vector<64x1xf32> to vector<64x16xf32>
    %67 = arith.mulf %65, %66 : vector<64x16xf32>
    %68 = vector.extract_strided_slice %57 {offsets = [16, 0], sizes = [64, 16], strides = [1, 1]} : vector<96x16xf32> to vector<64x16xf32>
    %69 = vector.extract_strided_slice %57 {offsets = [17, 0], sizes = [64, 16], strides = [1, 1]} : vector<96x16xf32> to vector<64x16xf32>
    %70 = vector.broadcast %33 : vector<64x1xf32> to vector<64x16xf32>
    %71 = arith.mulf %69, %70 : vector<64x16xf32>
    %72 = vector.extract_strided_slice %57 {offsets = [23, 0], sizes = [64, 16], strides = [1, 1]} : vector<96x16xf32> to vector<64x16xf32>
    %73 = vector.broadcast %30 : vector<64x1xf32> to vector<64x16xf32>
    %74 = arith.mulf %72, %73 : vector<64x16xf32>
    %75 = vector.extract_strided_slice %57 {offsets = [24, 0], sizes = [64, 16], strides = [1, 1]} : vector<96x16xf32> to vector<64x16xf32>
    %76 = vector.extract_strided_slice %57 {offsets = [25, 0], sizes = [64, 16], strides = [1, 1]} : vector<96x16xf32> to vector<64x16xf32>
    %77 = vector.broadcast %33 : vector<64x1xf32> to vector<64x16xf32>
    %78 = arith.mulf %76, %77 : vector<64x16xf32>
    %79 = tpu.concatenate %60, %61, %64, %67, %68, %71, %74, %75, %78 in 1 : vector<64x16xf32>, vector<64x16xf32>, vector<64x16xf32>, vector<64x16xf32>, vector<64x16xf32>, vector<64x16xf32>, vector<64x16xf32>, vector<64x16xf32>, vector<64x16xf32> -> vector<64x144xf32>
    %80 = arith.truncf %79 : vector<64x144xf32> to vector<64x144xbf16>
    %c0_32 = arith.constant 0 : index
    %c0_33 = arith.constant 0 : index
    %c0_34 = arith.constant 0 : index
    %81 = vector.load %arg6[%c0_32, %c0_33, %c0_34] : memref<3x144x8xbf16, #tpu.memory_space<vmem>>, vector<1x144x8xbf16>
    %82 = vector.shape_cast %81 : vector<1x144x8xbf16> to vector<144x8xbf16>
    %cst_35 = arith.constant dense<0.000000e+00> : vector<64x8xf32>
    %83 = tpu.matmul %80, %82, %cst_35 {dimension_numbers = #tpu.dot_dimension_numbers<[1], [0], [0], [1], [0, 0, 1, 1], [], []>} : vector<64x144xbf16>, vector<144x8xbf16>, vector<64x8xf32> -> vector<64x8xf32>
    %c0_36 = arith.constant 0 : index
    %c0_37 = arith.constant 0 : index
    %c16_38 = arith.constant 16 : index
    %84 = vector.load %arg7[%c0_36, %c0_37, %c16_38] : memref<1x64x128xf32, #tpu.memory_space<vmem>>, vector<1x64x8xf32>
    %85 = vector.shape_cast %84 : vector<1x64x8xf32> to vector<64x8xf32>
    %86 = vector.shape_cast %83 : vector<64x8xf32> to vector<1x64x8xf32>
    tpu.vector_store %arg7[%c0_36, %c0_37, %c16_38], %86 {strides = array<i32>} : memref<1x64x128xf32, #tpu.memory_space<vmem>>, vector<1x64x8xf32>,
    %c0_39 = arith.constant 0 : index
    %c0_40 = arith.constant 0 : index
    %c0_41 = arith.constant 0 : index
    %87 = vector.load %arg7[%c0_39, %c0_40, %c0_41] : memref<1x64x128xf32, #tpu.memory_space<vmem>>, vector<1x64x128xf32>
    %88 = vector.shape_cast %87 : vector<1x64x128xf32> to vector<64x128xf32>
    %c1 = arith.constant 1 : index
    %c0_42 = arith.constant 0 : index
    %c0_43 = arith.constant 0 : index
    %89 = vector.load %arg2[%c1, %c0_42, %c0_43] : memref<3x1x128xf32, #tpu.memory_space<vmem>>, vector<1x1x128xf32>
    %90 = vector.shape_cast %89 : vector<1x1x128xf32> to vector<1x128xf32>
    %91 = vector.broadcast %90 : vector<1x128xf32> to vector<64x128xf32>
    %92 = arith.mulf %88, %91 : vector<64x128xf32>
    %c1_44 = arith.constant 1 : index
    %c0_45 = arith.constant 0 : index
    %c0_46 = arith.constant 0 : index
    %93 = vector.load %arg3[%c1_44, %c0_45, %c0_46] : memref<3x1x128xf32, #tpu.memory_space<vmem>>, vector<1x1x128xf32>
    %94 = vector.shape_cast %93 : vector<1x1x128xf32> to vector<1x128xf32>
    %95 = vector.broadcast %94 : vector<1x128xf32> to vector<64x128xf32>
    %96 = arith.addf %92, %95 : vector<64x128xf32>
    %cst_47 = arith.constant 0.000000e+00 : f32
    %97 = vector.broadcast %cst_47 : f32 to vector<64x128xf32>
    %98 = arith.maximumf %96, %97 : vector<64x128xf32>
    %99 = arith.truncf %98 : vector<64x128xf32> to vector<64x128xbf16>
    %c1_48 = arith.constant 1 : index
    %c0_49 = arith.constant 0 : index
    %c0_50 = arith.constant 0 : index
    %100 = vector.load %arg4[%c1_48, %c0_49, %c0_50] : memref<3x128x16xbf16, #tpu.memory_space<vmem>>, vector<1x128x16xbf16>
    %101 = vector.shape_cast %100 : vector<1x128x16xbf16> to vector<128x16xbf16>
    %cst_51 = arith.constant dense<0.000000e+00> : vector<64x16xf32>
    %102 = tpu.matmul %99, %101, %cst_51 {dimension_numbers = #tpu.dot_dimension_numbers<[1], [0], [0], [1], [0, 0, 1, 1], [], []>} : vector<64x128xbf16>, vector<128x16xbf16>, vector<64x16xf32> -> vector<64x16xf32>
    %c1_52 = arith.constant 1 : index
    %c0_53 = arith.constant 0 : index
    %c0_54 = arith.constant 0 : index
    %103 = vector.load %arg5[%c1_52, %c0_53, %c0_54] : memref<3x1x16xf32, #tpu.memory_space<vmem>>, vector<1x1x16xf32>
    %104 = vector.shape_cast %103 : vector<1x1x16xf32> to vector<1x16xf32>
    %105 = vector.broadcast %104 : vector<1x16xf32> to vector<64x16xf32>
    %106 = arith.addf %102, %105 : vector<64x16xf32>
    %cst_55 = arith.constant 0.000000e+00 : f32
    %107 = vector.broadcast %cst_55 : f32 to vector<64x16xf32>
    %108 = arith.maximumf %106, %107 : vector<64x16xf32>
    %109 = tpu.concatenate %34, %108, %34 in 0 : vector<16x16xf32>, vector<64x16xf32>, vector<16x16xf32> -> vector<96x16xf32>
    %110 = vector.extract_strided_slice %109 {offsets = [7, 0], sizes = [64, 16], strides = [1, 1]} : vector<96x16xf32> to vector<64x16xf32>
    %111 = vector.broadcast %30 : vector<64x1xf32> to vector<64x16xf32>
    %112 = arith.mulf %110, %111 : vector<64x16xf32>
    %113 = vector.extract_strided_slice %109 {offsets = [8, 0], sizes = [64, 16], strides = [1, 1]} : vector<96x16xf32> to vector<64x16xf32>
    %114 = vector.extract_strided_slice %109 {offsets = [9, 0], sizes = [64, 16], strides = [1, 1]} : vector<96x16xf32> to vector<64x16xf32>
    %115 = vector.broadcast %33 : vector<64x1xf32> to vector<64x16xf32>
    %116 = arith.mulf %114, %115 : vector<64x16xf32>
    %117 = vector.extract_strided_slice %109 {offsets = [15, 0], sizes = [64, 16], strides = [1, 1]} : vector<96x16xf32> to vector<64x16xf32>
    %118 = vector.broadcast %30 : vector<64x1xf32> to vector<64x16xf32>
    %119 = arith.mulf %117, %118 : vector<64x16xf32>
    %120 = vector.extract_strided_slice %109 {offsets = [16, 0], sizes = [64, 16], strides = [1, 1]} : vector<96x16xf32> to vector<64x16xf32>
    %121 = vector.extract_strided_slice %109 {offsets = [17, 0], sizes = [64, 16], strides = [1, 1]} : vector<96x16xf32> to vector<64x16xf32>
    %122 = vector.broadcast %33 : vector<64x1xf32> to vector<64x16xf32>
    %123 = arith.mulf %121, %122 : vector<64x16xf32>
    %124 = vector.extract_strided_slice %109 {offsets = [23, 0], sizes = [64, 16], strides = [1, 1]} : vector<96x16xf32> to vector<64x16xf32>
    %125 = vector.broadcast %30 : vector<64x1xf32> to vector<64x16xf32>
    %126 = arith.mulf %124, %125 : vector<64x16xf32>
    %127 = vector.extract_strided_slice %109 {offsets = [24, 0], sizes = [64, 16], strides = [1, 1]} : vector<96x16xf32> to vector<64x16xf32>
    %128 = vector.extract_strided_slice %109 {offsets = [25, 0], sizes = [64, 16], strides = [1, 1]} : vector<96x16xf32> to vector<64x16xf32>
    %129 = vector.broadcast %33 : vector<64x1xf32> to vector<64x16xf32>
    %130 = arith.mulf %128, %129 : vector<64x16xf32>
    %131 = tpu.concatenate %112, %113, %116, %119, %120, %123, %126, %127, %130 in 1 : vector<64x16xf32>, vector<64x16xf32>, vector<64x16xf32>, vector<64x16xf32>, vector<64x16xf32>, vector<64x16xf32>, vector<64x16xf32>, vector<64x16xf32>, vector<64x16xf32> -> vector<64x144xf32>
    %132 = arith.truncf %131 : vector<64x144xf32> to vector<64x144xbf16>
    %c1_56 = arith.constant 1 : index
    %c0_57 = arith.constant 0 : index
    %c0_58 = arith.constant 0 : index
    %133 = vector.load %arg6[%c1_56, %c0_57, %c0_58] : memref<3x144x8xbf16, #tpu.memory_space<vmem>>, vector<1x144x8xbf16>
    %134 = vector.shape_cast %133 : vector<1x144x8xbf16> to vector<144x8xbf16>
    %cst_59 = arith.constant dense<0.000000e+00> : vector<64x8xf32>
    %135 = tpu.matmul %132, %134, %cst_59 {dimension_numbers = #tpu.dot_dimension_numbers<[1], [0], [0], [1], [0, 0, 1, 1], [], []>} : vector<64x144xbf16>, vector<144x8xbf16>, vector<64x8xf32> -> vector<64x8xf32>
    %c0_60 = arith.constant 0 : index
    %c0_61 = arith.constant 0 : index
    %c24 = arith.constant 24 : index
    %136 = vector.load %arg7[%c0_60, %c0_61, %c24] : memref<1x64x128xf32, #tpu.memory_space<vmem>>, vector<1x64x8xf32>
    %137 = vector.shape_cast %136 : vector<1x64x8xf32> to vector<64x8xf32>
    %138 = vector.shape_cast %135 : vector<64x8xf32> to vector<1x64x8xf32>
    tpu.vector_store %arg7[%c0_60, %c0_61, %c24], %138 {strides = array<i32>} : memref<1x64x128xf32, #tpu.memory_space<vmem>>, vector<1x64x8xf32>,
    %c0_62 = arith.constant 0 : index
    %c0_63 = arith.constant 0 : index
    %c0_64 = arith.constant 0 : index
    %139 = vector.load %arg7[%c0_62, %c0_63, %c0_64] : memref<1x64x128xf32, #tpu.memory_space<vmem>>, vector<1x64x128xf32>
    %140 = vector.shape_cast %139 : vector<1x64x128xf32> to vector<64x128xf32>
    %c2 = arith.constant 2 : index
    %c0_65 = arith.constant 0 : index
    %c0_66 = arith.constant 0 : index
    %141 = vector.load %arg2[%c2, %c0_65, %c0_66] : memref<3x1x128xf32, #tpu.memory_space<vmem>>, vector<1x1x128xf32>
    %142 = vector.shape_cast %141 : vector<1x1x128xf32> to vector<1x128xf32>
    %143 = vector.broadcast %142 : vector<1x128xf32> to vector<64x128xf32>
    %144 = arith.mulf %140, %143 : vector<64x128xf32>
    %c2_67 = arith.constant 2 : index
    %c0_68 = arith.constant 0 : index
    %c0_69 = arith.constant 0 : index
    %145 = vector.load %arg3[%c2_67, %c0_68, %c0_69] : memref<3x1x128xf32, #tpu.memory_space<vmem>>, vector<1x1x128xf32>
    %146 = vector.shape_cast %145 : vector<1x1x128xf32> to vector<1x128xf32>
    %147 = vector.broadcast %146 : vector<1x128xf32> to vector<64x128xf32>
    %148 = arith.addf %144, %147 : vector<64x128xf32>
    %cst_70 = arith.constant 0.000000e+00 : f32
    %149 = vector.broadcast %cst_70 : f32 to vector<64x128xf32>
    %150 = arith.maximumf %148, %149 : vector<64x128xf32>
    %151 = arith.truncf %150 : vector<64x128xf32> to vector<64x128xbf16>
    %c2_71 = arith.constant 2 : index
    %c0_72 = arith.constant 0 : index
    %c0_73 = arith.constant 0 : index
    %152 = vector.load %arg4[%c2_71, %c0_72, %c0_73] : memref<3x128x16xbf16, #tpu.memory_space<vmem>>, vector<1x128x16xbf16>
    %153 = vector.shape_cast %152 : vector<1x128x16xbf16> to vector<128x16xbf16>
    %cst_74 = arith.constant dense<0.000000e+00> : vector<64x16xf32>
    %154 = tpu.matmul %151, %153, %cst_74 {dimension_numbers = #tpu.dot_dimension_numbers<[1], [0], [0], [1], [0, 0, 1, 1], [], []>} : vector<64x128xbf16>, vector<128x16xbf16>, vector<64x16xf32> -> vector<64x16xf32>
    %c2_75 = arith.constant 2 : index
    %c0_76 = arith.constant 0 : index
    %c0_77 = arith.constant 0 : index
    %155 = vector.load %arg5[%c2_75, %c0_76, %c0_77] : memref<3x1x16xf32, #tpu.memory_space<vmem>>, vector<1x1x16xf32>
    %156 = vector.shape_cast %155 : vector<1x1x16xf32> to vector<1x16xf32>
    %157 = vector.broadcast %156 : vector<1x16xf32> to vector<64x16xf32>
    %158 = arith.addf %154, %157 : vector<64x16xf32>
    %cst_78 = arith.constant 0.000000e+00 : f32
    %159 = vector.broadcast %cst_78 : f32 to vector<64x16xf32>
    %160 = arith.maximumf %158, %159 : vector<64x16xf32>
    %161 = tpu.concatenate %34, %160, %34 in 0 : vector<16x16xf32>, vector<64x16xf32>, vector<16x16xf32> -> vector<96x16xf32>
    %162 = vector.extract_strided_slice %161 {offsets = [7, 0], sizes = [64, 16], strides = [1, 1]} : vector<96x16xf32> to vector<64x16xf32>
    %163 = vector.broadcast %30 : vector<64x1xf32> to vector<64x16xf32>
    %164 = arith.mulf %162, %163 : vector<64x16xf32>
    %165 = vector.extract_strided_slice %161 {offsets = [8, 0], sizes = [64, 16], strides = [1, 1]} : vector<96x16xf32> to vector<64x16xf32>
    %166 = vector.extract_strided_slice %161 {offsets = [9, 0], sizes = [64, 16], strides = [1, 1]} : vector<96x16xf32> to vector<64x16xf32>
    %167 = vector.broadcast %33 : vector<64x1xf32> to vector<64x16xf32>
    %168 = arith.mulf %166, %167 : vector<64x16xf32>
    %169 = vector.extract_strided_slice %161 {offsets = [15, 0], sizes = [64, 16], strides = [1, 1]} : vector<96x16xf32> to vector<64x16xf32>
    %170 = vector.broadcast %30 : vector<64x1xf32> to vector<64x16xf32>
    %171 = arith.mulf %169, %170 : vector<64x16xf32>
    %172 = vector.extract_strided_slice %161 {offsets = [16, 0], sizes = [64, 16], strides = [1, 1]} : vector<96x16xf32> to vector<64x16xf32>
    %173 = vector.extract_strided_slice %161 {offsets = [17, 0], sizes = [64, 16], strides = [1, 1]} : vector<96x16xf32> to vector<64x16xf32>
    %174 = vector.broadcast %33 : vector<64x1xf32> to vector<64x16xf32>
    %175 = arith.mulf %173, %174 : vector<64x16xf32>
    %176 = vector.extract_strided_slice %161 {offsets = [23, 0], sizes = [64, 16], strides = [1, 1]} : vector<96x16xf32> to vector<64x16xf32>
    %177 = vector.broadcast %30 : vector<64x1xf32> to vector<64x16xf32>
    %178 = arith.mulf %176, %177 : vector<64x16xf32>
    %179 = vector.extract_strided_slice %161 {offsets = [24, 0], sizes = [64, 16], strides = [1, 1]} : vector<96x16xf32> to vector<64x16xf32>
    %180 = vector.extract_strided_slice %161 {offsets = [25, 0], sizes = [64, 16], strides = [1, 1]} : vector<96x16xf32> to vector<64x16xf32>
    %181 = vector.broadcast %33 : vector<64x1xf32> to vector<64x16xf32>
    %182 = arith.mulf %180, %181 : vector<64x16xf32>
    %183 = tpu.concatenate %164, %165, %168, %171, %172, %175, %178, %179, %182 in 1 : vector<64x16xf32>, vector<64x16xf32>, vector<64x16xf32>, vector<64x16xf32>, vector<64x16xf32>, vector<64x16xf32>, vector<64x16xf32>, vector<64x16xf32>, vector<64x16xf32> -> vector<64x144xf32>
    %184 = arith.truncf %183 : vector<64x144xf32> to vector<64x144xbf16>
    %c2_79 = arith.constant 2 : index
    %c0_80 = arith.constant 0 : index
    %c0_81 = arith.constant 0 : index
    %185 = vector.load %arg6[%c2_79, %c0_80, %c0_81] : memref<3x144x8xbf16, #tpu.memory_space<vmem>>, vector<1x144x8xbf16>
    %186 = vector.shape_cast %185 : vector<1x144x8xbf16> to vector<144x8xbf16>
    %cst_82 = arith.constant dense<0.000000e+00> : vector<64x8xf32>
    %187 = tpu.matmul %184, %186, %cst_82 {dimension_numbers = #tpu.dot_dimension_numbers<[1], [0], [0], [1], [0, 0, 1, 1], [], []>} : vector<64x144xbf16>, vector<144x8xbf16>, vector<64x8xf32> -> vector<64x8xf32>
    %c0_83 = arith.constant 0 : index
    %c0_84 = arith.constant 0 : index
    %c32 = arith.constant 32 : index
    %188 = vector.load %arg7[%c0_83, %c0_84, %c32] : memref<1x64x128xf32, #tpu.memory_space<vmem>>, vector<1x64x8xf32>
    %189 = vector.shape_cast %188 : vector<1x64x8xf32> to vector<64x8xf32>
    %190 = vector.shape_cast %187 : vector<64x8xf32> to vector<1x64x8xf32>
    tpu.vector_store %arg7[%c0_83, %c0_84, %c32], %190 {strides = array<i32>} : memref<1x64x128xf32, #tpu.memory_space<vmem>>, vector<1x64x8xf32>,
    return
  }
  func.func @transform_0(%arg0: i32) -> (i32, i32, i32) {
    %c0_i32 = arith.constant 0 : i32
    %c0_i32_0 = arith.constant 0 : i32
    %c0_i32_1 = arith.constant 0 : i32
    return %arg0, %c0_i32, %c0_i32_0 : i32, i32, i32
  }
  func.func @transform_1(%arg0: i32) -> (i32, i32, i32) {
    %c0_i32 = arith.constant 0 : i32
    %c0_i32_0 = arith.constant 0 : i32
    %c0_i32_1 = arith.constant 0 : i32
    %c0_i32_2 = arith.constant 0 : i32
    return %c0_i32, %c0_i32_0, %c0_i32_1 : i32, i32, i32
  }
  func.func @transform_2(%arg0: i32) -> (i32, i32, i32) {
    %c0_i32 = arith.constant 0 : i32
    %c0_i32_0 = arith.constant 0 : i32
    %c0_i32_1 = arith.constant 0 : i32
    %c0_i32_2 = arith.constant 0 : i32
    return %c0_i32, %c0_i32_0, %c0_i32_1 : i32, i32, i32
  }
  func.func @transform_3(%arg0: i32) -> (i32, i32, i32) {
    %c0_i32 = arith.constant 0 : i32
    %c0_i32_0 = arith.constant 0 : i32
    %c0_i32_1 = arith.constant 0 : i32
    %c0_i32_2 = arith.constant 0 : i32
    return %c0_i32, %c0_i32_0, %c0_i32_1 : i32, i32, i32
  }
  func.func @transform_4(%arg0: i32) -> (i32, i32, i32) {
    %c0_i32 = arith.constant 0 : i32
    %c0_i32_0 = arith.constant 0 : i32
    %c0_i32_1 = arith.constant 0 : i32
    %c0_i32_2 = arith.constant 0 : i32
    return %c0_i32, %c0_i32_0, %c0_i32_1 : i32, i32, i32
  }
  func.func @transform_5(%arg0: i32) -> (i32, i32, i32) {
    %c0_i32 = arith.constant 0 : i32
    %c0_i32_0 = arith.constant 0 : i32
    %c0_i32_1 = arith.constant 0 : i32
    %c0_i32_2 = arith.constant 0 : i32
    return %c0_i32, %c0_i32_0, %c0_i32_1 : i32, i32, i32
  }
  func.func @transform_6(%arg0: i32) -> (i32, i32, i32) {
    %c0_i32 = arith.constant 0 : i32
    %c0_i32_0 = arith.constant 0 : i32
    %c0_i32_1 = arith.constant 0 : i32
    return %arg0, %c0_i32, %c0_i32_0 : i32, i32, i32
  }
}

</mosaic_0001>

<llo_original>
// kernel: dense_block_forward.1
$region0: #{dense_block_forward.1}
  #allocation0 [shape = 'u32[]', space=smem, size = 0x4, offset = 0x4, fixed_abs, tag = 'smem constant byte address 0x4 - core index']
  #allocation1 [shape = 'u32[72,128]{1,0:T(1,128)}', space=vmem, size = 0x9000, scoped, tag = 'internal scratch']
  %s0 = inlined_call_operand.vmem [shape: f32[2,64,16], index: 0, kind: input, shape index: {}]
  %s1 = inlined_call_operand.vmem [shape: f32[3,1,128], index: 1, kind: input, shape index: {}]
  %s2 = inlined_call_operand.vmem [shape: f32[3,1,128], index: 2, kind: input, shape index: {}]
  %s3 = inlined_call_operand.vmem [shape: bf16[3,128,16], index: 3, kind: input, shape index: {}]
  %s4 = inlined_call_operand.vmem [shape: f32[3,1,16], index: 4, kind: input, shape index: {}]
  %s5 = inlined_call_operand.vmem [shape: bf16[3,144,8], index: 5, kind: input, shape index: {}]
  %s6 = inlined_call_operand.vmem [shape: f32[2,64,128], index: 6, kind: output, shape index: {}]
  %s7 = sld [smem:[#allocation0]]
  $region57: #{dense_block_forward.1} parent=0
    _
  %s9 = ssub.s32 1, %s7
  %s10 = scalar_select 0, %s9, %s7
  loop: start=0, step=1, limit=4
  $region2: #{dense_block_forward.1} parent=0 // loop_pre_header
    _
  $region3: #{dense_block_forward.1} parent=0 // loop_header
    %s12 = sphi 0, %s16
    %p13 = scmp.ge.s32.totalorder %s12, 4
    %s22 = sphi 0, %s24
    %s25 = sphi 0, %s22
    %s26 = sphi 0, %s25
    %s42 = sphi 0, %s26
    %s46 = sphi 0, %s46
    %s48 = sphi 0, %s46
    %s49 = sphi 0, %s48
    %s63 = sphi 0, %s49
    %s67 = sphi 0, %s67
    %s69 = sphi 0, %s67
    %s70 = sphi 0, %s69
    %s84 = sphi 0, %s70
    %s88 = sphi 0, %s88
    %s90 = sphi 0, %s88
    %s91 = sphi 0, %s90
    %s105 = sphi 0, %s91
    %s109 = sphi 0, %s109
    %s111 = sphi 0, %s109
    %s112 = sphi 0, %s111
    %s126 = sphi 0, %s112
    %s130 = sphi 0, %s130
    %s132 = sphi 0, %s130
    %s133 = sphi 0, %s132
    %s147 = sphi 0, %s133
    %s153 = sphi 0, %s155
    %s156 = sphi 0, %s153
    %s157 = sphi 0, %s156
    %s173 = sphi 0, %s157
  $region4: #{dense_block_forward.1} parent=0 // loop_header_branch
    %15 = sbr.rel (%p13) target = $region8
  $region5: #{dense_block_forward.1} parent=0 // loop_body
    %s17 = ssub.s32 %s12, 1
    %s18 = ssub.s32 %s12, 2
    %s19 = sadd.s32 %s12, 1
    %s20 = ssub.s32 %s12, %s19
    %p21 = scmp.eq.s32.totalorder %s20, 0
    %s23 = sadd.s32 %s22, 1
    %s24 = scalar_select %p21, %s22, %s23
    %p27 = pneg %p21
    %p28 = scmp.eq.s32.totalorder %s12, 1
    %p29 = por %p27, %p28
    %p30 = scmp.ne.s32.totalorder %s22, %s25
    %p31 = scmp.eq.s32.totalorder %s12, 0
    %p32 = por %p30, %p31
    %p33 = scmp.ne.s32.totalorder %s22, %s25
    %p34 = scmp.eq.s32.totalorder %s17, 1
    %p35 = por %p33, %p34
    %p36 = scmp.ne.s32.totalorder %s25, %s26
    %p37 = scmp.eq.s32.totalorder %s17, 0
    %p38 = por %p36, %p37
    %p39 = scmp.ne.s32.totalorder %s25, %s26
    %p40 = scmp.eq.s32.totalorder %s18, 1
    %p41 = por %p39, %p40
    %p43 = scmp.ne.s32.totalorder %s26, %s42
    %p44 = scmp.eq.s32.totalorder %s18, 0
    %p45 = por %p43, %p44
    %s47 = sadd.s32 %s46, 1
    %p50 = scmp.eq.s32.totalorder %s12, 1
    %p51 = scmp.ne.s32.totalorder %s46, %s48
    %p52 = scmp.eq.s32.totalorder %s12, 0
    %p53 = por %p51, %p52
    %p54 = scmp.ne.s32.totalorder %s46, %s48
    %p55 = scmp.eq.s32.totalorder %s17, 1
    %p56 = por %p54, %p55
    %p57 = scmp.ne.s32.totalorder %s48, %s49
    %p58 = scmp.eq.s32.totalorder %s17, 0
    %p59 = por %p57, %p58
    %p60 = scmp.ne.s32.totalorder %s48, %s49
    %p61 = scmp.eq.s32.totalorder %s18, 1
    %p62 = por %p60, %p61
    %p64 = scmp.ne.s32.totalorder %s49, %s63
    %p65 = scmp.eq.s32.totalorder %s18, 0
    %p66 = por %p64, %p65
    %s68 = sadd.s32 %s67, 1
    %p71 = scmp.eq.s32.totalorder %s12, 1
    %p72 = scmp.ne.s32.totalorder %s67, %s69
    %p73 = scmp.eq.s32.totalorder %s12, 0
    %p74 = por %p72, %p73
    %p75 = scmp.ne.s32.totalorder %s67, %s69
    %p76 = scmp.eq.s32.totalorder %s17, 1
    %p77 = por %p75, %p76
    %p78 = scmp.ne.s32.totalorder %s69, %s70
    %p79 = scmp.eq.s32.totalorder %s17, 0
    %p80 = por %p78, %p79
    %p81 = scmp.ne.s32.totalorder %s69, %s70
    %p82 = scmp.eq.s32.totalorder %s18, 1
    %p83 = por %p81, %p82
    %p85 = scmp.ne.s32.totalorder %s70, %s84
    %p86 = scmp.eq.s32.totalorder %s18, 0
    %p87 = por %p85, %p86
    %s89 = sadd.s32 %s88, 1
    %p92 = scmp.eq.s32.totalorder %s12, 1
    %p93 = scmp.ne.s32.totalorder %s88, %s90
    %p94 = scmp.eq.s32.totalorder %s12, 0
    %p95 = por %p93, %p94
    %p96 = scmp.ne.s32.totalorder %s88, %s90
    %p97 = scmp.eq.s32.totalorder %s17, 1
    %p98 = por %p96, %p97
    %p99 = scmp.ne.s32.totalorder %s90, %s91
    %p100 = scmp.eq.s32.totalorder %s17, 0
    %p101 = por %p99, %p100
    %p102 = scmp.ne.s32.totalorder %s90, %s91
    %p103 = scmp.eq.s32.totalorder %s18, 1
    %p104 = por %p102, %p103
    %p106 = scmp.ne.s32.totalorder %s91, %s105
    %p107 = scmp.eq.s32.totalorder %s18, 0
    %p108 = por %p106, %p107
    %s110 = sadd.s32 %s109, 1
    %p113 = scmp.eq.s32.totalorder %s12, 1
    %p114 = scmp.ne.s32.totalorder %s109, %s111
    %p115 = scmp.eq.s32.totalorder %s12, 0
    %p116 = por %p114, %p115
    %p117 = scmp.ne.s32.totalorder %s109, %s111
    %p118 = scmp.eq.s32.totalorder %s17, 1
    %p119 = por %p117, %p118
    %p120 = scmp.ne.s32.totalorder %s111, %s112
    %p121 = scmp.eq.s32.totalorder %s17, 0
    %p122 = por %p120, %p121
    %p123 = scmp.ne.s32.totalorder %s111, %s112
    %p124 = scmp.eq.s32.totalorder %s18, 1
    %p125 = por %p123, %p124
    %p127 = scmp.ne.s32.totalorder %s112, %s126
    %p128 = scmp.eq.s32.totalorder %s18, 0
    %p129 = por %p127, %p128
    %s131 = sadd.s32 %s130, 1
    %p134 = scmp.eq.s32.totalorder %s12, 1
    %p135 = scmp.ne.s32.totalorder %s130, %s132
    %p136 = scmp.eq.s32.totalorder %s12, 0
    %p137 = por %p135, %p136
    %p138 = scmp.ne.s32.totalorder %s130, %s132
    %p139 = scmp.eq.s32.totalorder %s17, 1
    %p140 = por %p138, %p139
    %p141 = scmp.ne.s32.totalorder %s132, %s133
    %p142 = scmp.eq.s32.totalorder %s17, 0
    %p143 = por %p141, %p142
    %p144 = scmp.ne.s32.totalorder %s132, %s133
    %p145 = scmp.eq.s32.totalorder %s18, 1
    %p146 = por %p144, %p145
    %p148 = scmp.ne.s32.totalorder %s133, %s147
    %p149 = scmp.eq.s32.totalorder %s18, 0
    %p150 = por %p148, %p149
    %s151 = ssub.s32 %s12, %s19
    %p152 = scmp.eq.s32.totalorder %s151, 0
    %s154 = sadd.s32 %s153, 1
    %s155 = scalar_select %p152, %s153, %s154
    %p158 = pneg %p152
    %p159 = scmp.eq.s32.totalorder %s12, 1
    %p160 = por %p158, %p159
    %p161 = scmp.ne.s32.totalorder %s153, %s156
    %p162 = scmp.eq.s32.totalorder %s12, 0
    %p163 = por %p161, %p162
    %p164 = scmp.ne.s32.totalorder %s153, %s156
    %p165 = scmp.eq.s32.totalorder %s17, 1
    %p166 = por %p164, %p165
    %p167 = scmp.ne.s32.totalorder %s156, %s157
    %p168 = scmp.eq.s32.totalorder %s17, 0
    %p169 = por %p167, %p168
    %p170 = scmp.ne.s32.totalorder %s156, %s157
    %p171 = scmp.eq.s32.totalorder %s18, 1
    %p172 = por %p170, %p171
    %p174 = scmp.ne.s32.totalorder %s157, %s173
    %p175 = scmp.eq.s32.totalorder %s18, 0
    %p176 = por %p174, %p175
    %p177 = scmp.le.s32.totalorder 1, %s12
    %p178 = scmp.lt.s32.totalorder %s12, 3
    %p179 = pnand %p177, %p178
    %p180 = pneg %p179
    // Predicated region
    $region9: #{dense_block_forward.1} parent=5 // pred_check
      _
    $region10: #{dense_block_forward.1} parent=5 // pred_check_branch
      %182 = sbr.rel (%p179) target = $region12
    $region11: #{dense_block_forward.1} parent=5 // pred_region
      %s183 = ssub.s32 %s12, 1
      // Predicated region
      $region13: #{dense_block_forward.1} parent=11 // pred_check
        %p184 = pneg %p59
      $region14: #{dense_block_forward.1} parent=11 // pred_check_branch
        %186 = sbr.rel (%p184) target = $region16
      $region15: #{dense_block_forward.1} parent=11 // pred_region
        _
      $region16: #{dense_block_forward.1} parent=11 // pred_fallthru
        _
      // Predicated region
      $region17: #{dense_block_forward.1} parent=11 // pred_check
        %p187 = pneg %p80
      $region18: #{dense_block_forward.1} parent=11 // pred_check_branch
        %189 = sbr.rel (%p187) target = $region20
      $region19: #{dense_block_forward.1} parent=11 // pred_region
        _
      $region20: #{dense_block_forward.1} parent=11 // pred_fallthru
        _
      // Predicated region
      $region21: #{dense_block_forward.1} parent=11 // pred_check
        %p190 = pneg %p101
      $region22: #{dense_block_forward.1} parent=11 // pred_check_branch
        %192 = sbr.rel (%p190) target = $region24
      $region23: #{dense_block_forward.1} parent=11 // pred_region
        _
      $region24: #{dense_block_forward.1} parent=11 // pred_fallthru
        _
      // Predicated region
      $region25: #{dense_block_forward.1} parent=11 // pred_check
        %p193 = pneg %p122
      $region26: #{dense_block_forward.1} parent=11 // pred_check_branch
        %195 = sbr.rel (%p193) target = $region28
      $region27: #{dense_block_forward.1} parent=11 // pred_region
        _
      $region28: #{dense_block_forward.1} parent=11 // pred_fallthru
        _
      // Predicated region
      $region29: #{dense_block_forward.1} parent=11 // pred_check
        %p196 = pneg %p143
      $region30: #{dense_block_forward.1} parent=11 // pred_check_branch
        %198 = sbr.rel (%p196) target = $region32
      $region31: #{dense_block_forward.1} parent=11 // pred_region
        _
      $region32: #{dense_block_forward.1} parent=11 // pred_fallthru
        _
    $region12: #{dense_block_forward.1} parent=5 // pred_fallthru
      _
    %p199 = scmp.lt.s32.totalorder %s12, 2
    // Predicated region
    $region33: #{dense_block_forward.1} parent=5 // pred_check
      %p200 = pneg %p199
    $region34: #{dense_block_forward.1} parent=5 // pred_check_branch
      %202 = sbr.rel (%p200) target = $region36
    $region35: #{dense_block_forward.1} parent=5 // pred_region
      // Predicated region
      $region37: #{dense_block_forward.1} parent=35 // pred_check
        %p203 = pneg %p32
      $region38: #{dense_block_forward.1} parent=35 // pred_check_branch
        %205 = sbr.rel (%p203) target = $region40
      $region39: #{dense_block_forward.1} parent=35 // pred_region
        %p206 = scmp.lt.s32.totalorder %s12, 1
        %s207 = scalar_select %p206, %s12, 1
        %s208 = smul.addr %s207, 8
        %s209 = smul.addr %s208, 8
        %s210 = scalar_lea.vmem %s0, %s209
      $region40: #{dense_block_forward.1} parent=35 // pred_fallthru
        _
    $region36: #{dense_block_forward.1} parent=5 // pred_fallthru
      _
    %p211 = scmp.le.s32.totalorder 1, %s12
    %p212 = scmp.lt.s32.totalorder %s12, 3
    %p213 = pnand %p211, %p212
    %p214 = pneg %p213
    // Predicated region
    $region41: #{dense_block_forward.1} parent=5 // pred_check
      _
    $region42: #{dense_block_forward.1} parent=5 // pred_check_branch
      %216 = sbr.rel (%p213) target = $region44
    $region43: #{dense_block_forward.1} parent=5 // pred_region
      %s217 = ssub.s32 %s12, 1
      %p218 = scmp.lt.s32.totalorder %s17, 1
      %s219 = scalar_select %p218, %s17, 1
      %s220 = smul.addr %s219, 8
      %s221 = smul.addr %s220, 8
      %s222 = scalar_lea.vmem %s0, %s221
      %p223 = pneg %p38
      %p224 = pneg %p35
      %p225 = pneg %p59
      %p226 = pneg %p56
      %p227 = pneg %p80
      %p228 = pneg %p77
      %p229 = pneg %p101
      %p230 = pneg %p98
      %p231 = pneg %p122
      %p232 = pneg %p119
      %p233 = pneg %p143
      %p234 = pneg %p140
      %p235 = pneg %p169
      %p236 = pneg %p166
      %p237 = scmp.lt.s32.totalorder %s17, 1
      %s238 = scalar_select %p237, %s17, 1
      %s239 = smul.addr %s238, 8
      %s240 = smul.addr %s239, 8
      %s241 = scalar_lea.vmem %s6, %s240
      %p242 = scmp.lt.s32.totalorder %s17, 1
      %s243 = scalar_select %p242, %s17, 1
      %s244 = smul.addr %s243, 8
      %s245 = smul.addr %s244, 8
      %s246 = scalar_lea.vmem %s0, %s245
      %p247 = scmp.lt.s32.totalorder %s17, 1
      %s248 = scalar_select %p247, %s17, 1
      %s249 = smul.addr %s248, 8
      %s250 = smul.addr %s249, 8
      %s251 = scalar_lea.vmem %s6, %s250
      %v253 = vld [vmem:[%s246] sm:$0xff]
      %v254 = vld [vmem:[%s246 + $0x8] sm:$0xff]
      %v255 = vld [vmem:[%s246 + $0x10] sm:$0xff]
      %v256 = vld [vmem:[%s246 + $0x18] sm:$0xff]
      %v257 = vld [vmem:[%s246 + $0x20] sm:$0xff]
      %v258 = vld [vmem:[%s246 + $0x28] sm:$0xff]
      %v259 = vld [vmem:[%s246 + $0x30] sm:$0xff]
      %v260 = vld [vmem:[%s246 + $0x38] sm:$0xff]
      %vm261 = vcmask 130048
      %262 = vst.msk [vmem:[%s251] sm:$0xff] %vm261, %v253
      %263 = vst.msk [vmem:[%s251 + $0x8] sm:$0xff] %vm261, %v254
      %264 = vst.msk [vmem:[%s251 + $0x10] sm:$0xff] %vm261, %v255
      %265 = vst.msk [vmem:[%s251 + $0x18] sm:$0xff] %vm261, %v256
      %266 = vst.msk [vmem:[%s251 + $0x20] sm:$0xff] %vm261, %v257
      %267 = vst.msk [vmem:[%s251 + $0x28] sm:$0xff] %vm261, %v258
      %268 = vst.msk [vmem:[%s251 + $0x30] sm:$0xff] %vm261, %v259
      %269 = vst.msk [vmem:[%s251 + $0x38] sm:$0xff] %vm261, %v260
      %vm270 = vcmask 1047680
      %271 = vst.msk [vmem:[%s251] sm:$0xff] %vm270, 0.0
      %272 = vst.msk [vmem:[%s251 + $0x8] sm:$0xff] %vm270, 0.0
      %273 = vst.msk [vmem:[%s251 + $0x10] sm:$0xff] %vm270, 0.0
      %274 = vst.msk [vmem:[%s251 + $0x18] sm:$0xff] %vm270, 0.0
      %275 = vst.msk [vmem:[%s251 + $0x20] sm:$0xff] %vm270, 0.0
      %276 = vst.msk [vmem:[%s251 + $0x28] sm:$0xff] %vm270, 0.0
      %277 = vst.msk [vmem:[%s251 + $0x30] sm:$0xff] %vm270, 0.0
      %278 = vst.msk [vmem:[%s251 + $0x38] sm:$0xff] %vm270, 0.0
      %v279 = vlaneseq
      %v280 = vshrl.u32 %v279, 7
      %v281 = vadd.s32 %v280, 8
      %v282 = vadd.s32 %v280, 16
      %v283 = vadd.s32 %v280, 24
      %v284 = vadd.s32 %v280, 32
      %v285 = vadd.s32 %v280, 40
      %v286 = vadd.s32 %v280, 48
      %v287 = vadd.s32 %v280, 56
      %vm288 = vcmp.lt.s32.totalorder %v280, 0
      %v289 = vsub.s32 0, %v280
      %v290 = vsel %vm288, %v289, %v280
      %v291 = vshrl.u32 %v290, 3
      %v292 = vand.u32 %v290, 7
      %v293 = vsub.s32 0, %v292
      %v294 = vsel %vm288, %v293, %v292
      %vm295 = vcmp.lt.s32.totalorder %v281, 0
      %v296 = vsub.s32 0, %v281
      %v297 = vsel %vm295, %v296, %v281
      %v298 = vshrl.u32 %v297, 3
      %v299 = vand.u32 %v297, 7
      %v300 = vsub.s32 0, %v299
      %v301 = vsel %vm295, %v300, %v299
      %vm302 = vcmp.lt.s32.totalorder %v282, 0
      %v303 = vsub.s32 0, %v282
      %v304 = vsel %vm302, %v303, %v282
      %v305 = vshrl.u32 %v304, 3
      %v306 = vand.u32 %v304, 7
      %v307 = vsub.s32 0, %v306
      %v308 = vsel %vm302, %v307, %v306
      %vm309 = vcmp.lt.s32.totalorder %v283, 0
      %v310 = vsub.s32 0, %v283
      %v311 = vsel %vm309, %v310, %v283
      %v312 = vshrl.u32 %v311, 3
      %v313 = vand.u32 %v311, 7
      %v314 = vsub.s32 0, %v313
      %v315 = vsel %vm309, %v314, %v313
      %vm316 = vcmp.lt.s32.totalorder %v284, 0
      %v317 = vsub.s32 0, %v284
      %v318 = vsel %vm316, %v317, %v284
      %v319 = vshrl.u32 %v318, 3
      %v320 = vand.u32 %v318, 7
      %v321 = vsub.s32 0, %v320
      %v322 = vsel %vm316, %v321, %v320
      %vm323 = vcmp.lt.s32.totalorder %v285, 0
      %v324 = vsub.s32 0, %v285
      %v325 = vsel %vm323, %v324, %v285
      %v326 = vshrl.u32 %v325, 3
      %v327 = vand.u32 %v325, 7
      %v328 = vsub.s32 0, %v327
      %v329 = vsel %vm323, %v328, %v327
      %vm330 = vcmp.lt.s32.totalorder %v286, 0
      %v331 = vsub.s32 0, %v286
      %v332 = vsel %vm330, %v331, %v286
      %v333 = vshrl.u32 %v332, 3
      %v334 = vand.u32 %v332, 7
      %v335 = vsub.s32 0, %v334
      %v336 = vsel %vm330, %v335, %v334
      %vm337 = vcmp.lt.s32.totalorder %v287, 0
      %v338 = vsub.s32 0, %v287
      %v339 = vsel %vm337, %v338, %v287
      %v340 = vshrl.u32 %v339, 3
      %v341 = vand.u32 %v339, 7
      %v342 = vsub.s32 0, %v341
      %v343 = vsel %vm337, %v342, %v341
      %vm344 = vcmp.ne.s32.totalorder %v294, 0
      %vm345 = vcmp.ne.s32.totalorder %v301, 0
      %vm346 = vcmp.ne.s32.totalorder %v308, 0
      %vm347 = vcmp.ne.s32.totalorder %v315, 0
      %vm348 = vcmp.ne.s32.totalorder %v322, 0
      %vm349 = vcmp.ne.s32.totalorder %v329, 0
      %vm350 = vcmp.ne.s32.totalorder %v336, 0
      %vm351 = vcmp.ne.s32.totalorder %v343, 0
      %vm352 = vcmp.lt.s32.totalorder %v294, 0
      %vm353 = vcmp.lt.s32.totalorder %v301, 0
      %vm354 = vcmp.lt.s32.totalorder %v308, 0
      %vm355 = vcmp.lt.s32.totalorder %v315, 0
      %vm356 = vcmp.lt.s32.totalorder %v322, 0
      %vm357 = vcmp.lt.s32.totalorder %v329, 0
      %vm358 = vcmp.lt.s32.totalorder %v336, 0
      %vm359 = vcmp.lt.s32.totalorder %v343, 0
      %vm360 = vmand %vm352, %vm344
      %vm361 = vmand %vm353, %vm345
      %vm362 = vmand %vm354, %vm346
      %vm363 = vmand %vm355, %vm347
      %vm364 = vmand %vm356, %vm348
      %vm365 = vmand %vm357, %vm349
      %vm366 = vmand %vm358, %vm350
      %vm367 = vmand %vm359, %vm351
      %v368 = vadd.s32 %v294, 8
      %v369 = vadd.s32 %v301, 8
      %v370 = vadd.s32 %v308, 8
      %v371 = vadd.s32 %v315, 8
      %v372 = vadd.s32 %v322, 8
      %v373 = vadd.s32 %v329, 8
      %v374 = vadd.s32 %v336, 8
      %v375 = vadd.s32 %v343, 8
      %v376 = vsel %vm360, %v368, %v294
      %v377 = vsel %vm361, %v369, %v301
      %v378 = vsel %vm362, %v370, %v308
      %v379 = vsel %vm363, %v371, %v315
      %v380 = vsel %vm364, %v372, %v322
      %v381 = vsel %vm365, %v373, %v329
      %v382 = vsel %vm366, %v374, %v336
      %v383 = vsel %vm367, %v375, %v343
      %vm384 = vcmp.ge.s32.totalorder %v376, 1
      %vm385 = vcmp.ge.s32.totalorder %v377, 1
      %vm386 = vcmp.ge.s32.totalorder %v378, 1
      %vm387 = vcmp.ge.s32.totalorder %v379, 1
      %vm388 = vcmp.ge.s32.totalorder %v380, 1
      %vm389 = vcmp.ge.s32.totalorder %v381, 1
      %vm390 = vcmp.ge.s32.totalorder %v382, 1
      %vm391 = vcmp.ge.s32.totalorder %v383, 1
      %v392 = vsel %vm384, 1.0, 0.0
      %v393 = vsel %vm385, 1.0, 0.0
      %v394 = vsel %vm386, 1.0, 0.0
      %v395 = vsel %vm387, 1.0, 0.0
      %v396 = vsel %vm388, 1.0, 0.0
      %v397 = vsel %vm389, 1.0, 0.0
      %v398 = vsel %vm390, 1.0, 0.0
      %v399 = vsel %vm391, 1.0, 0.0
      %vm400 = vcmp.le.s32.totalorder %v376, 6
      %vm401 = vcmp.le.s32.totalorder %v377, 6
      %vm402 = vcmp.le.s32.totalorder %v378, 6
      %vm403 = vcmp.le.s32.totalorder %v379, 6
      %vm404 = vcmp.le.s32.totalorder %v380, 6
      %vm405 = vcmp.le.s32.totalorder %v381, 6
      %vm406 = vcmp.le.s32.totalorder %v382, 6
      %vm407 = vcmp.le.s32.totalorder %v383, 6
      %v408 = vsel %vm400, 1.0, 0.0
      %v409 = vsel %vm401, 1.0, 0.0
      %v410 = vsel %vm402, 1.0, 0.0
      %v411 = vsel %vm403, 1.0, 0.0
      %v412 = vsel %vm404, 1.0, 0.0
      %v413 = vsel %vm405, 1.0, 0.0
      %v414 = vsel %vm406, 1.0, 0.0
      %v415 = vsel %vm407, 1.0, 0.0
      %v416 = vld [vmem:[%s251] sm:$0xff]
      %v417 = vld [vmem:[%s251 + $0x8] sm:$0xff]
      %v418 = vld [vmem:[%s251 + $0x10] sm:$0xff]
      %v419 = vld [vmem:[%s251 + $0x18] sm:$0xff]
      %v420 = vld [vmem:[%s251 + $0x20] sm:$0xff]
      %v421 = vld [vmem:[%s251 + $0x28] sm:$0xff]
      %v422 = vld [vmem:[%s251 + $0x30] sm:$0xff]
      %v423 = vld [vmem:[%s251 + $0x38] sm:$0xff]
      %v424 = vld [vmem:[%s1] sm:$0x1]
      %v426 = vperm.slane %v424, 0
      %v428 = vmul.f32 %v416, %v426
      %v429 = vmul.f32 %v417, %v426
      %v430 = vmul.f32 %v418, %v426
      %v431 = vmul.f32 %v419, %v426
      %v432 = vmul.f32 %v420, %v426
      %v433 = vmul.f32 %v421, %v426
      %v434 = vmul.f32 %v422, %v426
      %v435 = vmul.f32 %v423, %v426
      %v436 = vld [vmem:[%s2] sm:$0x1]
      %v438 = vperm.slane %v436, 0
      %v440 = vadd.f32 %v428, %v438
      %v441 = vadd.f32 %v429, %v438
      %v442 = vadd.f32 %v430, %v438
      %v443 = vadd.f32 %v431, %v438
      %v444 = vadd.f32 %v432, %v438
      %v445 = vadd.f32 %v433, %v438
      %v446 = vadd.f32 %v434, %v438
      %v447 = vadd.f32 %v435, %v438
      %v448 = vmax.f32 %v440, 0.0
      %v449 = vmax.f32 %v441, 0.0
      %v450 = vmax.f32 %v442, 0.0
      %v451 = vmax.f32 %v443, 0.0
      %v452 = vmax.f32 %v444, 0.0
      %v453 = vmax.f32 %v445, 0.0
      %v454 = vmax.f32 %v446, 0.0
      %v455 = vmax.f32 %v447, 0.0
      %v456 = vpack.c.bf16 %v449, %v448
      %v457 = vpack.c.bf16 %v451, %v450
      %v458 = vpack.c.bf16 %v453, %v452
      %v459 = vpack.c.bf16 %v455, %v454
      %v460 = vld [vmem:[%s3] sm:$0xf]
      %v461 = vld [vmem:[%s3 + $0x4] sm:$0xf]
      %v462 = vld [vmem:[%s3 + $0x8] sm:$0xf]
      %v463 = vld [vmem:[%s3 + $0xc] sm:$0xf]
      %v464 = vld [vmem:[%s3 + $0x10] sm:$0xf]
      %v465 = vld [vmem:[%s3 + $0x14] sm:$0xf]
      %v466 = vld [vmem:[%s3 + $0x18] sm:$0xf]
      %v467 = vld [vmem:[%s3 + $0x1c] sm:$0xf]
      %v468 = vld [vmem:[%s3 + $0x20] sm:$0xf]
      %v469 = vld [vmem:[%s3 + $0x24] sm:$0xf]
      %v470 = vld [vmem:[%s3 + $0x28] sm:$0xf]
      %v471 = vld [vmem:[%s3 + $0x2c] sm:$0xf]
      %v472 = vld [vmem:[%s3 + $0x30] sm:$0xf]
      %v473 = vld [vmem:[%s3 + $0x34] sm:$0xf]
      %v474 = vld [vmem:[%s3 + $0x38] sm:$0xf]
      %v475 = vld [vmem:[%s3 + $0x3c] sm:$0xf]
      %v476 = vld [vmem:[%s4] sm:$0x1]
      %v478 = vperm.slane %v476, 0
      %v496 = vunpack.c.l.b16 %v460
      %v497 = vunpack.c.l.b16 %v461
      %v498 = vunpack.c.l.b16 %v462
      %v499 = vunpack.c.l.b16 %v463
      %v500 = vunpack.c.l.b16 %v464
      %v501 = vunpack.c.l.b16 %v465
      %v502 = vunpack.c.l.b16 %v466
      %v503 = vunpack.c.l.b16 %v467
      %v504 = vunpack.c.l.b16 %v468
      %v505 = vunpack.c.l.b16 %v469
      %v506 = vunpack.c.l.b16 %v470
      %v507 = vunpack.c.l.b16 %v471
      %v508 = vunpack.c.l.b16 %v472
      %v509 = vunpack.c.l.b16 %v473
      %v510 = vunpack.c.l.b16 %v474
      %v511 = vunpack.c.l.b16 %v475
      %v512 = vpack.c.b16 %v497, %v496
      %v513 = vpack.c.b16 %v499, %v498
      %v514 = vpack.c.b16 %v501, %v500
      %v515 = vpack.c.b16 %v503, %v502
      %v516 = vpack.c.b16 %v505, %v504
      %v517 = vpack.c.b16 %v507, %v506
      %v518 = vpack.c.b16 %v509, %v508
      %v519 = vpack.c.b16 %v511, %v510
      %528 = vmatpush.bf16.msra.mxu0 %v519
      %529 = vmatpush.bf16.msra.mxu0 %v518
      %530 = vmatpush.bf16.msra.mxu0 %v517
      %531 = vmatpush.bf16.msra.mxu0 %v516
      %532 = vmatpush.bf16.msra.mxu0 %v515
      %533 = vmatpush.bf16.msra.mxu0 %v514
      %534 = vmatpush.bf16.msra.mxu0 %v513
      %535 = vmatpush.bf16.msra.mxu0 %v512
      %536 = vmatmul.bf16.gmra.mxu0 %v456
      %v537 = vpop.f32.mrf.mxu0
      %v538 = vadd.f32 %v478, %v537
      %v539 = vpop.f32.mrf.mxu0
      %v540 = vadd.f32 %v478, %v539
      %541 = vmatmul.bf16.gmra.mxu0 %v457
      %v542 = vpop.f32.mrf.mxu0
      %v543 = vadd.f32 %v478, %v542
      %v544 = vpop.f32.mrf.mxu0
      %v545 = vadd.f32 %v478, %v544
      %546 = vmatmul.bf16.gmra.mxu0 %v458
      %v547 = vpop.f32.mrf.mxu0
      %v548 = vadd.f32 %v478, %v547
      %v549 = vpop.f32.mrf.mxu0
      %v550 = vadd.f32 %v478, %v549
      %551 = vmatmul.bf16.gmra.mxu0 %v459
      %v552 = vpop.f32.mrf.mxu0
      %v553 = vadd.f32 %v478, %v552
      %v554 = vpop.f32.mrf.mxu0
      %v555 = vadd.f32 %v478, %v554
      %556 = vdwg.mxu0
      %v557 = vmax.f32 %v538, 0.0
      %v558 = vmax.f32 %v540, 0.0
      %v559 = vmax.f32 %v543, 0.0
      %v560 = vmax.f32 %v545, 0.0
      %v561 = vmax.f32 %v548, 0.0
      %v562 = vmax.f32 %v550, 0.0
      %v563 = vmax.f32 %v553, 0.0
      %v564 = vmax.f32 %v555, 0.0
      %vm573 = vcmask 1046528
      %v574 = vrot.slane %v392, 1
      %v575 = vrot.slane %v393, 1
      %v576 = vsel %vm573, %v574, %v575
      %v577 = vrot.slane %v394, 1
      %v578 = vsel %vm573, %v575, %v577
      %v579 = vrot.slane %v395, 1
      %v580 = vsel %vm573, %v577, %v579
      %v581 = vrot.slane %v396, 1
      %v582 = vsel %vm573, %v579, %v581
      %v583 = vrot.slane %v397, 1
      %v584 = vsel %vm573, %v581, %v583
      %v585 = vrot.slane %v398, 1
      %v586 = vsel %vm573, %v583, %v585
      %v587 = vrot.slane %v399, 1
      %v588 = vsel %vm573, %v585, %v587
      %v598 = vmul.f32 %v574, 0.0
      %v599 = vmul.f32 %v576, 0.0
      %v600 = vmul.f32 %v557, %v578
      %v601 = vmul.f32 %v558, %v580
      %v602 = vmul.f32 %v559, %v582
      %v603 = vmul.f32 %v560, %v584
      %v604 = vmul.f32 %v561, %v586
      %v605 = vmul.f32 %v562, %v588
      %v606 = vmul.f32 %v563, %v587
      %vm615 = vcmask 1040384
      %v616 = vrot.slane %v408, 7
      %v617 = vrot.slane %v409, 7
      %v618 = vsel %vm615, %v616, %v617
      %v619 = vrot.slane %v410, 7
      %v620 = vsel %vm615, %v617, %v619
      %v621 = vrot.slane %v411, 7
      %v622 = vsel %vm615, %v619, %v621
      %v623 = vrot.slane %v412, 7
      %v624 = vsel %vm615, %v621, %v623
      %v625 = vrot.slane %v413, 7
      %v626 = vsel %vm615, %v623, %v625
      %v627 = vrot.slane %v414, 7
      %v628 = vsel %vm615, %v625, %v627
      %v629 = vrot.slane %v415, 7
      %v630 = vsel %vm615, %v627, %v629
      %v640 = vmul.f32 %v616, 0.0
      %v641 = vmul.f32 %v557, %v618
      %v642 = vmul.f32 %v558, %v620
      %v643 = vmul.f32 %v559, %v622
      %v644 = vmul.f32 %v560, %v624
      %v645 = vmul.f32 %v561, %v626
      %v646 = vmul.f32 %v562, %v628
      %v647 = vmul.f32 %v563, %v630
      %v648 = vmul.f32 %v564, %v629
      %v649 = vmul.f32 %v557, %v576
      %v650 = vmul.f32 %v558, %v578
      %v651 = vmul.f32 %v559, %v580
      %v652 = vmul.f32 %v560, %v582
      %v653 = vmul.f32 %v561, %v584
      %v654 = vmul.f32 %v562, %v586
      %v655 = vmul.f32 %v563, %v588
      %v656 = vmul.f32 %v564, %v587
      %v657 = vmul.f32 %v557, %v616
      %v658 = vmul.f32 %v558, %v618
      %v659 = vmul.f32 %v559, %v620
      %v660 = vmul.f32 %v560, %v622
      %v661 = vmul.f32 %v561, %v624
      %v662 = vmul.f32 %v562, %v626
      %v663 = vmul.f32 %v563, %v628
      %v664 = vmul.f32 %v564, %v630
      %v665 = vmul.f32 %v629, 0.0
      %v666 = vmul.f32 %v557, %v574
      %v667 = vmul.f32 %v558, %v576
      %v668 = vmul.f32 %v559, %v578
      %v669 = vmul.f32 %v560, %v580
      %v670 = vmul.f32 %v561, %v582
      %v671 = vmul.f32 %v562, %v584
      %v672 = vmul.f32 %v563, %v586
      %v673 = vmul.f32 %v564, %v588
      %v674 = vmul.f32 %v587, 0.0
      %v675 = vmul.f32 %v558, %v616
      %v676 = vmul.f32 %v559, %v618
      %v677 = vmul.f32 %v560, %v620
      %v678 = vmul.f32 %v561, %v622
      %v679 = vmul.f32 %v562, %v624
      %v680 = vmul.f32 %v563, %v626
      %v681 = vmul.f32 %v564, %v628
      %v682 = vmul.f32 %v630, 0.0
      %v691 = vrot.slane 0.0, 1
      %v692 = vrot.slane %v557, 1
      %v693 = vsel %vm573, %v691, %v692
      %v694 = vrot.slane %v558, 1
      %v695 = vsel %vm573, %v692, %v694
      %v696 = vrot.slane %v559, 1
      %v697 = vsel %vm573, %v694, %v696
      %v698 = vrot.slane %v560, 1
      %v699 = vsel %vm573, %v696, %v698
      %v700 = vrot.slane %v561, 1
      %v701 = vsel %vm573, %v698, %v700
      %v702 = vrot.slane %v562, 1
      %v703 = vsel %vm573, %v700, %v702
      %v704 = vrot.slane %v563, 1
      %v705 = vsel %vm573, %v702, %v704
      %706 = vrot.lane.b32.xlu0 %v691, 16
      %v707 = vpop.permute.xlu0 %706
      %708 = vrot.lane.b32.xlu0 %v693, 16
      %v709 = vpop.permute.xlu0 %708
      %710 = vrot.lane.b32.xlu0 %v695, 16
      %v711 = vpop.permute.xlu0 %710
      %712 = vrot.lane.b32.xlu0 %v697, 16
      %v713 = vpop.permute.xlu0 %712
      %714 = vrot.lane.b32.xlu0 %v699, 16
      %v715 = vpop.permute.xlu0 %714
      %716 = vrot.lane.b32.xlu0 %v701, 16
      %v717 = vpop.permute.xlu0 %716
      %718 = vrot.lane.b32.xlu0 %v703, 16
      %v719 = vpop.permute.xlu0 %718
      %720 = vrot.lane.b32.xlu0 %v705, 16
      %v721 = vpop.permute.xlu0 %720
      %722 = vrot.lane.b32.xlu0 %v704, 16
      %v723 = vpop.permute.xlu0 %722
      %vm742 = vcmask 1045504
      %v743 = vrot.slane %v640, 2
      %v744 = vrot.slane %v641, 2
      %v745 = vsel %vm742, %v743, %v744
      %v746 = vrot.slane %v642, 2
      %v747 = vsel %vm742, %v744, %v746
      %v748 = vrot.slane %v643, 2
      %v749 = vsel %vm742, %v746, %v748
      %v750 = vrot.slane %v644, 2
      %v751 = vsel %vm742, %v748, %v750
      %v752 = vrot.slane %v645, 2
      %v753 = vsel %vm742, %v750, %v752
      %v754 = vrot.slane %v646, 2
      %v755 = vsel %vm742, %v752, %v754
      %v756 = vrot.slane %v647, 2
      %v757 = vsel %vm742, %v754, %v756
      %v758 = vrot.slane %v648, 2
      %v759 = vsel %vm742, %v756, %v758
      %760 = vrot.lane.b32.xlu0 %v743, 32
      %v761 = vpop.permute.xlu0 %760
      %762 = vrot.lane.b32.xlu0 %v745, 32
      %v763 = vpop.permute.xlu0 %762
      %764 = vrot.lane.b32.xlu0 %v747, 32
      %v765 = vpop.permute.xlu0 %764
      %766 = vrot.lane.b32.xlu0 %v749, 32
      %v767 = vpop.permute.xlu0 %766
      %768 = vrot.lane.b32.xlu0 %v751, 32
      %v769 = vpop.permute.xlu0 %768
      %770 = vrot.lane.b32.xlu0 %v753, 32
      %v771 = vpop.permute.xlu0 %770
      %772 = vrot.lane.b32.xlu0 %v755, 32
      %v773 = vpop.permute.xlu0 %772
      %774 = vrot.lane.b32.xlu0 %v757, 32
      %v775 = vpop.permute.xlu0 %774
      %776 = vrot.lane.b32.xlu0 %v759, 32
      %v777 = vpop.permute.xlu0 %776
      %796 = vrot.lane.b32.xlu0 %v598, 48
      %v797 = vpop.permute.xlu0 %796
      %798 = vrot.lane.b32.xlu0 %v649, 48
      %v799 = vpop.permute.xlu0 %798
      %800 = vrot.lane.b32.xlu0 %v650, 48
      %v801 = vpop.permute.xlu0 %800
      %802 = vrot.lane.b32.xlu0 %v651, 48
      %v803 = vpop.permute.xlu0 %802
      %804 = vrot.lane.b32.xlu0 %v652, 48
      %v805 = vpop.permute.xlu0 %804
      %806 = vrot.lane.b32.xlu0 %v653, 48
      %v807 = vpop.permute.xlu0 %806
      %808 = vrot.lane.b32.xlu0 %v654, 48
      %v809 = vpop.permute.xlu0 %808
      %810 = vrot.lane.b32.xlu0 %v655, 48
      %v811 = vpop.permute.xlu0 %810
      %812 = vrot.lane.b32.xlu0 %v656, 48
      %v813 = vpop.permute.xlu0 %812
      %v824 = vrot.slane %v564, 1
      %v825 = vsel %vm573, %v704, %v824
      %826 = vrot.lane.b32.xlu0 %v692, 64
      %v827 = vpop.permute.xlu0 %826
      %828 = vrot.lane.b32.xlu0 %v695, 64
      %v829 = vpop.permute.xlu0 %828
      %830 = vrot.lane.b32.xlu0 %v697, 64
      %v831 = vpop.permute.xlu0 %830
      %832 = vrot.lane.b32.xlu0 %v699, 64
      %v833 = vpop.permute.xlu0 %832
      %834 = vrot.lane.b32.xlu0 %v701, 64
      %v835 = vpop.permute.xlu0 %834
      %836 = vrot.lane.b32.xlu0 %v703, 64
      %v837 = vpop.permute.xlu0 %836
      %838 = vrot.lane.b32.xlu0 %v705, 64
      %v839 = vpop.permute.xlu0 %838
      %840 = vrot.lane.b32.xlu0 %v825, 64
      %v841 = vpop.permute.xlu0 %840
      %842 = vrot.lane.b32.xlu0 %v824, 64
      %v843 = vpop.permute.xlu0 %842
      %v862 = vrot.slane %v657, 2
      %v863 = vrot.slane %v658, 2
      %v864 = vsel %vm742, %v862, %v863
      %v865 = vrot.slane %v659, 2
      %v866 = vsel %vm742, %v863, %v865
      %v867 = vrot.slane %v660, 2
      %v868 = vsel %vm742, %v865, %v867
      %v869 = vrot.slane %v661, 2
      %v870 = vsel %vm742, %v867, %v869
      %v871 = vrot.slane %v662, 2
      %v872 = vsel %vm742, %v869, %v871
      %v873 = vrot.slane %v663, 2
      %v874 = vsel %vm742, %v871, %v873
      %v875 = vrot.slane %v664, 2
      %v876 = vsel %vm742, %v873, %v875
      %v877 = vrot.slane %v665, 2
      %v878 = vsel %vm742, %v875, %v877
      %879 = vrot.lane.b32.xlu0 %v862, 80
      %v880 = vpop.permute.xlu0 %879
      %881 = vrot.lane.b32.xlu0 %v864, 80
      %v882 = vpop.permute.xlu0 %881
      %883 = vrot.lane.b32.xlu0 %v866, 80
      %v884 = vpop.permute.xlu0 %883
      %885 = vrot.lane.b32.xlu0 %v868, 80
      %v886 = vpop.permute.xlu0 %885
      %887 = vrot.lane.b32.xlu0 %v870, 80
      %v888 = vpop.permute.xlu0 %887
      %889 = vrot.lane.b32.xlu0 %v872, 80
      %v890 = vpop.permute.xlu0 %889
      %891 = vrot.lane.b32.xlu0 %v874, 80
      %v892 = vpop.permute.xlu0 %891
      %893 = vrot.lane.b32.xlu0 %v876, 80
      %v894 = vpop.permute.xlu0 %893
      %895 = vrot.lane.b32.xlu0 %v878, 80
      %v896 = vpop.permute.xlu0 %895
      %915 = vrot.lane.b32.xlu0 %v666, 96
      %v916 = vpop.permute.xlu0 %915
      %917 = vrot.lane.b32.xlu0 %v667, 96
      %v918 = vpop.permute.xlu0 %917
      %919 = vrot.lane.b32.xlu0 %v668, 96
      %v920 = vpop.permute.xlu0 %919
      %921 = vrot.lane.b32.xlu0 %v669, 96
      %v922 = vpop.permute.xlu0 %921
      %923 = vrot.lane.b32.xlu0 %v670, 96
      %v924 = vpop.permute.xlu0 %923
      %925 = vrot.lane.b32.xlu0 %v671, 96
      %v926 = vpop.permute.xlu0 %925
      %927 = vrot.lane.b32.xlu0 %v672, 96
      %v928 = vpop.permute.xlu0 %927
      %929 = vrot.lane.b32.xlu0 %v673, 96
      %v930 = vpop.permute.xlu0 %929
      %931 = vrot.lane.b32.xlu0 %v674, 96
      %v932 = vpop.permute.xlu0 %931
      %v942 = vsel %vm573, %v824, %v691
      %943 = vrot.lane.b32.xlu0 %v694, 112
      %v944 = vpop.permute.xlu0 %943
      %945 = vrot.lane.b32.xlu0 %v697, 112
      %v946 = vpop.permute.xlu0 %945
      %947 = vrot.lane.b32.xlu0 %v699, 112
      %v948 = vpop.permute.xlu0 %947
      %949 = vrot.lane.b32.xlu0 %v701, 112
      %v950 = vpop.permute.xlu0 %949
      %951 = vrot.lane.b32.xlu0 %v703, 112
      %v952 = vpop.permute.xlu0 %951
      %953 = vrot.lane.b32.xlu0 %v705, 112
      %v954 = vpop.permute.xlu0 %953
      %955 = vrot.lane.b32.xlu0 %v825, 112
      %v956 = vpop.permute.xlu0 %955
      %957 = vrot.lane.b32.xlu0 %v942, 112
      %v958 = vpop.permute.xlu0 %957
      %959 = vrot.lane.b32.xlu0 %v691, 112
      %v960 = vpop.permute.xlu0 %959
      %v978 = vrot.slane %v675, 2
      %v979 = vrot.slane %v676, 2
      %v980 = vsel %vm742, %v978, %v979
      %v981 = vrot.slane %v677, 2
      %v982 = vsel %vm742, %v979, %v981
      %v983 = vrot.slane %v678, 2
      %v984 = vsel %vm742, %v981, %v983
      %v985 = vrot.slane %v679, 2
      %v986 = vsel %vm742, %v983, %v985
      %v987 = vrot.slane %v680, 2
      %v988 = vsel %vm742, %v985, %v987
      %v989 = vrot.slane %v681, 2
      %v990 = vsel %vm742, %v987, %v989
      %v991 = vrot.slane %v682, 2
      %v992 = vsel %vm742, %v989, %v991
      %v993 = vsel %vm742, %v991, %v877
      %v1003 = vsel %vm261, %v598, %v707
      %v1004 = vsel %vm261, %v599, %v709
      %v1005 = vsel %vm261, %v600, %v711
      %v1006 = vsel %vm261, %v601, %v713
      %v1007 = vsel %vm261, %v602, %v715
      %v1008 = vsel %vm261, %v603, %v717
      %v1009 = vsel %vm261, %v604, %v719
      %v1010 = vsel %vm261, %v605, %v721
      %v1011 = vsel %vm261, %v606, %v723
      %vm1012 = vcmask 261120
      %v1013 = vsel %vm1012, %v1003, %v761
      %v1014 = vsel %vm1012, %v1004, %v763
      %v1015 = vsel %vm1012, %v1005, %v765
      %v1016 = vsel %vm1012, %v1006, %v767
      %v1017 = vsel %vm1012, %v1007, %v769
      %v1018 = vsel %vm1012, %v1008, %v771
      %v1019 = vsel %vm1012, %v1009, %v773
      %v1020 = vsel %vm1012, %v1010, %v775
      %v1021 = vsel %vm1012, %v1011, %v777
      %vm1022 = vcmask 392192
      %v1023 = vsel %vm1022, %v1013, %v797
      %v1024 = vsel %vm1022, %v1014, %v799
      %v1025 = vsel %vm1022, %v1015, %v801
      %v1026 = vsel %vm1022, %v1016, %v803
      %v1027 = vsel %vm1022, %v1017, %v805
      %v1028 = vsel %vm1022, %v1018, %v807
      %v1029 = vsel %vm1022, %v1019, %v809
      %v1030 = vsel %vm1022, %v1020, %v811
      %v1031 = vsel %vm1022, %v1021, %v813
      %vm1032 = vcmask 523264
      %v1033 = vsel %vm1032, %v1023, %v827
      %v1034 = vsel %vm1032, %v1024, %v829
      %v1035 = vsel %vm1032, %v1025, %v831
      %v1036 = vsel %vm1032, %v1026, %v833
      %v1037 = vsel %vm1032, %v1027, %v835
      %v1038 = vsel %vm1032, %v1028, %v837
      %v1039 = vsel %vm1032, %v1029, %v839
      %v1040 = vsel %vm1032, %v1030, %v841
      %v1041 = vsel %vm1032, %v1031, %v843
      %vm1042 = vcmask 654336
      %v1043 = vsel %vm1042, %v1033, %v880
      %v1044 = vsel %vm1042, %v1034, %v882
      %v1045 = vsel %vm1042, %v1035, %v884
      %v1046 = vsel %vm1042, %v1036, %v886
      %v1047 = vsel %vm1042, %v1037, %v888
      %v1048 = vsel %vm1042, %v1038, %v890
      %v1049 = vsel %vm1042, %v1039, %v892
      %v1050 = vsel %vm1042, %v1040, %v894
      %v1051 = vsel %vm1042, %v1041, %v896
      %vm1052 = vcmask 785408
      %v1053 = vsel %vm1052, %v1043, %v916
      %v1054 = vsel %vm1052, %v1044, %v918
      %v1055 = vsel %vm1052, %v1045, %v920
      %v1056 = vsel %vm1052, %v1046, %v922
      %v1057 = vsel %vm1052, %v1047, %v924
      %v1058 = vsel %vm1052, %v1048, %v926
      %v1059 = vsel %vm1052, %v1049, %v928
      %v1060 = vsel %vm1052, %v1050, %v930
      %v1061 = vsel %vm1052, %v1051, %v932
      %vm1062 = vcmask 916480
      %v1063 = vsel %vm1062, %v1053, %v944
      %v1064 = vsel %vm1062, %v1054, %v946
      %v1065 = vsel %vm1062, %v1055, %v948
      %v1066 = vsel %vm1062, %v1056, %v950
      %v1067 = vsel %vm1062, %v1057, %v952
      %v1068 = vsel %vm1062, %v1058, %v954
      %v1069 = vsel %vm1062, %v1059, %v956
      %v1070 = vsel %vm1062, %v1060, %v958
      %v1071 = vsel %vm1062, %v1061, %v960
      %v1072 = vpack.c.bf16 %v1064, %v1063
      %v1073 = vpack.c.bf16 %v980, %v978
      %v1074 = vpack.c.bf16 %v1066, %v1065
      %v1075 = vpack.c.bf16 %v984, %v982
      %v1076 = vpack.c.bf16 %v1068, %v1067
      %v1077 = vpack.c.bf16 %v988, %v986
      %v1078 = vpack.c.bf16 %v1070, %v1069
      %v1079 = vpack.c.bf16 %v992, %v990
      %v1080 = vpack.c.bf16 %v1071, %v1071
      %v1081 = vpack.c.bf16 %v993, %v993
      %v1082 = vld [vmem:[%s5] sm:$0xf]
      %v1083 = vld [vmem:[%s5 + $0x4] sm:$0xf]
      %v1084 = vld [vmem:[%s5 + $0x8] sm:$0xf]
      %v1085 = vld [vmem:[%s5 + $0xc] sm:$0xf]
      %v1086 = vld [vmem:[%s5 + $0x10] sm:$0xf]
      %v1087 = vld [vmem:[%s5 + $0x14] sm:$0xf]
      %v1088 = vld [vmem:[%s5 + $0x18] sm:$0xf]
      %v1089 = vld [vmem:[%s5 + $0x1c] sm:$0xf]
      %v1090 = vld [vmem:[%s5 + $0x20] sm:$0xf]
      %v1091 = vld [vmem:[%s5 + $0x24] sm:$0xf]
      %v1092 = vld [vmem:[%s5 + $0x28] sm:$0xf]
      %v1093 = vld [vmem:[%s5 + $0x2c] sm:$0xf]
      %v1094 = vld [vmem:[%s5 + $0x30] sm:$0xf]
      %v1095 = vld [vmem:[%s5 + $0x34] sm:$0xf]
      %v1096 = vld [vmem:[%s5 + $0x38] sm:$0xf]
      %v1097 = vld [vmem:[%s5 + $0x3c] sm:$0xf]
      %v1098 = vld [vmem:[%s5 + $0x40] sm:$0xf]
      %v1099 = vld [vmem:[%s5 + $0x44] sm:$0xf]
      %vm1100 = vsmask.f32 4352
      %v1102 = vshrl.u32 %v1072, 16
      %v1104 = vrot.slane %v1102, 3
      %v1105 = vshll.u32 %v1072, 16
      %v1107 = vrot.slane %v1105, 4
      %v1108 = vor.u32 %v1104, %v1107
      %v1110 = vshrl.u32 %v1074, 16
      %v1112 = vrot.slane %v1110, 3
      %v1113 = vshll.u32 %v1074, 16
      %v1115 = vrot.slane %v1113, 4
      %v1116 = vor.u32 %v1112, %v1115
      %v1117 = vsel %vm1100, %v1108, %v1116
      %v1119 = vshrl.u32 %v1073, 16
      %v1121 = vrot.slane %v1119, 3
      %v1122 = vshll.u32 %v1073, 16
      %v1124 = vrot.slane %v1122, 4
      %v1125 = vor.u32 %v1121, %v1124
      %v1127 = vshrl.u32 %v1075, 16
      %v1129 = vrot.slane %v1127, 3
      %v1130 = vshll.u32 %v1075, 16
      %v1132 = vrot.slane %v1130, 4
      %v1133 = vor.u32 %v1129, %v1132
      %v1134 = vsel %vm1100, %v1125, %v1133
      %v1136 = vshrl.u32 %v1076, 16
      %v1138 = vrot.slane %v1136, 3
      %v1139 = vshll.u32 %v1076, 16
      %v1141 = vrot.slane %v1139, 4
      %v1142 = vor.u32 %v1138, %v1141
      %v1143 = vsel %vm1100, %v1116, %v1142
      %v1145 = vshrl.u32 %v1077, 16
      %v1147 = vrot.slane %v1145, 3
      %v1148 = vshll.u32 %v1077, 16
      %v1150 = vrot.slane %v1148, 4
      %v1151 = vor.u32 %v1147, %v1150
      %v1152 = vsel %vm1100, %v1133, %v1151
      %v1154 = vshrl.u32 %v1078, 16
      %v1156 = vrot.slane %v1154, 3
      %v1157 = vshll.u32 %v1078, 16
      %v1159 = vrot.slane %v1157, 4
      %v1160 = vor.u32 %v1156, %v1159
      %v1161 = vsel %vm1100, %v1142, %v1160
      %v1163 = vshrl.u32 %v1079, 16
      %v1165 = vrot.slane %v1163, 3
      %v1166 = vshll.u32 %v1079, 16
      %v1168 = vrot.slane %v1166, 4
      %v1169 = vor.u32 %v1165, %v1168
      %v1170 = vsel %vm1100, %v1151, %v1169
      %v1172 = vshrl.u32 %v1080, 16
      %v1174 = vrot.slane %v1172, 3
      %v1175 = vshll.u32 %v1080, 16
      %v1177 = vrot.slane %v1175, 4
      %v1178 = vor.u32 %v1174, %v1177
      %v1179 = vsel %vm1100, %v1160, %v1178
      %v1181 = vshrl.u32 %v1081, 16
      %v1183 = vrot.slane %v1181, 3
      %v1184 = vshll.u32 %v1081, 16
      %v1186 = vrot.slane %v1184, 4
      %v1187 = vor.u32 %v1183, %v1186
      %v1188 = vsel %vm1100, %v1169, %v1187
      %v1211 = vunpack.c.l.b16 %v1082
      %v1212 = vunpack.c.l.b16 %v1083
      %v1213 = vunpack.c.l.b16 %v1084
      %v1214 = vunpack.c.l.b16 %v1085
      %v1215 = vunpack.c.l.b16 %v1086
      %v1216 = vunpack.c.l.b16 %v1087
      %v1217 = vunpack.c.l.b16 %v1088
      %v1218 = vunpack.c.l.b16 %v1089
      %v1219 = vunpack.c.l.b16 %v1090
      %v1220 = vunpack.c.l.b16 %v1091
      %v1221 = vunpack.c.l.b16 %v1092
      %v1222 = vunpack.c.l.b16 %v1093
      %v1223 = vunpack.c.l.b16 %v1094
      %v1224 = vunpack.c.l.b16 %v1095
      %v1225 = vunpack.c.l.b16 %v1096
      %v1226 = vunpack.c.l.b16 %v1097
      %v1227 = vunpack.c.l.b16 %v1098
      %v1228 = vunpack.c.l.b16 %v1099
      %v1229 = vpack.c.b16 %v1212, %v1211
      %v1230 = vpack.c.b16 %v1214, %v1213
      %v1231 = vpack.c.b16 %v1216, %v1215
      %v1232 = vpack.c.b16 %v1218, %v1217
      %v1233 = vpack.c.b16 %v1220, %v1219
      %v1234 = vpack.c.b16 %v1222, %v1221
      %v1235 = vpack.c.b16 %v1224, %v1223
      %v1236 = vpack.c.b16 %v1226, %v1225
      %v1237 = vpack.c.b16 %v1228, %v1227
      %v1248 = vsel %vm261, %v1134, 0
      %v1251 = vsel %vm261, %v1152, 0
      %v1254 = vsel %vm261, %v1170, 0
      %v1257 = vsel %vm261, %v1188, 0
      %1259 = vmatpush.bf16.msra.mxu0 %v1236
      %1260 = vmatpush.bf16.msra.mxu0 %v1235
      %1261 = vmatpush.bf16.msra.mxu0 %v1234
      %1262 = vmatpush.bf16.msra.mxu0 %v1233
      %1263 = vmatpush.bf16.msra.mxu0 %v1232
      %1264 = vmatpush.bf16.msra.mxu0 %v1231
      %1265 = vmatpush.bf16.msra.mxu0 %v1230
      %1266 = vmatpush.bf16.msra.mxu0 %v1229
      %1267 = vmatmul.bf16.gmra.mxu0 %v1117
      %v1268 = vpop.f32.mrf.mxu0
      %v1269 = vadd.f32 0.0, %v1268
      %v1270 = vpop.f32.mrf.mxu0
      %v1271 = vadd.f32 0.0, %v1270
      %1272 = vmatmul.bf16.gmra.mxu0 %v1143
      %v1273 = vpop.f32.mrf.mxu0
      %v1274 = vadd.f32 0.0, %v1273
      %v1275 = vpop.f32.mrf.mxu0
      %v1276 = vadd.f32 0.0, %v1275
      %1277 = vmatmul.bf16.gmra.mxu0 %v1161
      %v1278 = vpop.f32.mrf.mxu0
      %v1279 = vadd.f32 0.0, %v1278
      %v1280 = vpop.f32.mrf.mxu0
      %v1281 = vadd.f32 0.0, %v1280
      %1282 = vmatmul.bf16.gmra.mxu0 %v1179
      %v1283 = vpop.f32.mrf.mxu0
      %v1284 = vadd.f32 0.0, %v1283
      %v1285 = vpop.f32.mrf.mxu0
      %v1286 = vadd.f32 0.0, %v1285
      %1287 = vdwg.mxu0
      %1288 = vmatpush.bf16.msra.mxu0 0
      %1289 = vmatpush.bf16.msra.mxu0 0
      %1290 = vmatpush.bf16.msra.mxu0 0
      %1291 = vmatpush.bf16.msra.mxu0 0
      %1292 = vmatpush.bf16.msra.mxu0 0
      %1293 = vmatpush.bf16.msra.mxu0 0
      %1294 = vmatpush.bf16.msra.mxu0 0
      %1295 = vmatpush.bf16.msra.mxu0 %v1237
      %1296 = vmatmul.bf16.gmra.mxu0 %v1248
      %v1297 = vpop.f32.mrf.mxu0
      %v1298 = vadd.f32 %v1269, %v1297
      %v1299 = vpop.f32.mrf.mxu0
      %v1300 = vadd.f32 %v1271, %v1299
      %1301 = vmatmul.bf16.gmra.mxu0 %v1251
      %v1302 = vpop.f32.mrf.mxu0
      %v1303 = vadd.f32 %v1274, %v1302
      %v1304 = vpop.f32.mrf.mxu0
      %v1305 = vadd.f32 %v1276, %v1304
      %1306 = vmatmul.bf16.gmra.mxu0 %v1254
      %v1307 = vpop.f32.mrf.mxu0
      %v1308 = vadd.f32 %v1279, %v1307
      %v1309 = vpop.f32.mrf.mxu0
      %v1310 = vadd.f32 %v1281, %v1309
      %1311 = vmatmul.bf16.gmra.mxu0 %v1257
      %v1312 = vpop.f32.mrf.mxu0
      %v1313 = vadd.f32 %v1284, %v1312
      %v1314 = vpop.f32.mrf.mxu0
      %v1315 = vadd.f32 %v1286, %v1314
      %1316 = vdwg.mxu0
      %1325 = vrot.lane.b32.xlu0 %v1298, 16
      %v1326 = vpop.permute.xlu0 %1325
      %1327 = vrot.lane.b32.xlu0 %v1300, 16
      %v1328 = vpop.permute.xlu0 %1327
      %1329 = vrot.lane.b32.xlu0 %v1303, 16
      %v1330 = vpop.permute.xlu0 %1329
      %1331 = vrot.lane.b32.xlu0 %v1305, 16
      %v1332 = vpop.permute.xlu0 %1331
      %1333 = vrot.lane.b32.xlu0 %v1308, 16
      %v1334 = vpop.permute.xlu0 %1333
      %1335 = vrot.lane.b32.xlu0 %v1310, 16
      %v1336 = vpop.permute.xlu0 %1335
      %1337 = vrot.lane.b32.xlu0 %v1313, 16
      %v1338 = vpop.permute.xlu0 %1337
      %1339 = vrot.lane.b32.xlu0 %v1315, 16
      %v1340 = vpop.permute.xlu0 %1339
      %vm1349 = vcmask 195712
      %1350 = vst.msk [vmem:[%s251] sm:$0xff] %vm1349, %v1326
      %1351 = vst.msk [vmem:[%s251 + $0x8] sm:$0xff] %vm1349, %v1328
      %1352 = vst.msk [vmem:[%s251 + $0x10] sm:$0xff] %vm1349, %v1330
      %1353 = vst.msk [vmem:[%s251 + $0x18] sm:$0xff] %vm1349, %v1332
      %1354 = vst.msk [vmem:[%s251 + $0x20] sm:$0xff] %vm1349, %v1334
      %1355 = vst.msk [vmem:[%s251 + $0x28] sm:$0xff] %vm1349, %v1336
      %1356 = vst.msk [vmem:[%s251 + $0x30] sm:$0xff] %vm1349, %v1338
      %1357 = vst.msk [vmem:[%s251 + $0x38] sm:$0xff] %vm1349, %v1340
      %v1358 = vld [vmem:[%s251] sm:$0xff]
      %v1359 = vld [vmem:[%s251 + $0x8] sm:$0xff]
      %v1360 = vld [vmem:[%s251 + $0x10] sm:$0xff]
      %v1361 = vld [vmem:[%s251 + $0x18] sm:$0xff]
      %v1362 = vld [vmem:[%s251 + $0x20] sm:$0xff]
      %v1363 = vld [vmem:[%s251 + $0x28] sm:$0xff]
      %v1364 = vld [vmem:[%s251 + $0x30] sm:$0xff]
      %v1365 = vld [vmem:[%s251 + $0x38] sm:$0xff]
      %s1366 = scalar_lea.vmem %s1, 1
      %v1367 = vld [vmem:[%s1366] sm:$0x1]
      %v1369 = vperm.slane %v1367, 0
      %v1371 = vmul.f32 %v1358, %v1369
      %v1372 = vmul.f32 %v1359, %v1369
      %v1373 = vmul.f32 %v1360, %v1369
      %v1374 = vmul.f32 %v1361, %v1369
      %v1375 = vmul.f32 %v1362, %v1369
      %v1376 = vmul.f32 %v1363, %v1369
      %v1377 = vmul.f32 %v1364, %v1369
      %v1378 = vmul.f32 %v1365, %v1369
      %s1379 = scalar_lea.vmem %s2, 1
      %v1380 = vld [vmem:[%s1379] sm:$0x1]
      %v1382 = vperm.slane %v1380, 0
      %v1384 = vadd.f32 %v1371, %v1382
      %v1385 = vadd.f32 %v1372, %v1382
      %v1386 = vadd.f32 %v1373, %v1382
      %v1387 = vadd.f32 %v1374, %v1382
      %v1388 = vadd.f32 %v1375, %v1382
      %v1389 = vadd.f32 %v1376, %v1382
      %v1390 = vadd.f32 %v1377, %v1382
      %v1391 = vadd.f32 %v1378, %v1382
      %v1392 = vmax.f32 %v1384, 0.0
      %v1393 = vmax.f32 %v1385, 0.0
      %v1394 = vmax.f32 %v1386, 0.0
      %v1395 = vmax.f32 %v1387, 0.0
      %v1396 = vmax.f32 %v1388, 0.0
      %v1397 = vmax.f32 %v1389, 0.0
      %v1398 = vmax.f32 %v1390, 0.0
      %v1399 = vmax.f32 %v1391, 0.0
      %v1400 = vpack.c.bf16 %v1393, %v1392
      %v1401 = vpack.c.bf16 %v1395, %v1394
      %v1402 = vpack.c.bf16 %v1397, %v1396
      %v1403 = vpack.c.bf16 %v1399, %v1398
      %s1404 = scalar_lea.vmem %s3, 64
      %v1405 = vld [vmem:[%s1404] sm:$0xf]
      %v1406 = vld [vmem:[%s1404 + $0x4] sm:$0xf]
      %v1407 = vld [vmem:[%s1404 + $0x8] sm:$0xf]
      %v1408 = vld [vmem:[%s1404 + $0xc] sm:$0xf]
      %v1409 = vld [vmem:[%s1404 + $0x10] sm:$0xf]
      %v1410 = vld [vmem:[%s1404 + $0x14] sm:$0xf]
      %v1411 = vld [vmem:[%s1404 + $0x18] sm:$0xf]
      %v1412 = vld [vmem:[%s1404 + $0x1c] sm:$0xf]
      %v1413 = vld [vmem:[%s1404 + $0x20] sm:$0xf]
      %v1414 = vld [vmem:[%s1404 + $0x24] sm:$0xf]
      %v1415 = vld [vmem:[%s1404 + $0x28] sm:$0xf]
      %v1416 = vld [vmem:[%s1404 + $0x2c] sm:$0xf]
      %v1417 = vld [vmem:[%s1404 + $0x30] sm:$0xf]
      %v1418 = vld [vmem:[%s1404 + $0x34] sm:$0xf]
      %v1419 = vld [vmem:[%s1404 + $0x38] sm:$0xf]
      %v1420 = vld [vmem:[%s1404 + $0x3c] sm:$0xf]
      %s1421 = scalar_lea.vmem %s4, 1
      %v1422 = vld [vmem:[%s1421] sm:$0x1]
      %v1424 = vperm.slane %v1422, 0
      %v1442 = vunpack.c.l.b16 %v1405
      %v1443 = vunpack.c.l.b16 %v1406
      %v1444 = vunpack.c.l.b16 %v1407
      %v1445 = vunpack.c.l.b16 %v1408
      %v1446 = vunpack.c.l.b16 %v1409
      %v1447 = vunpack.c.l.b16 %v1410
      %v1448 = vunpack.c.l.b16 %v1411
      %v1449 = vunpack.c.l.b16 %v1412
      %v1450 = vunpack.c.l.b16 %v1413
      %v1451 = vunpack.c.l.b16 %v1414
      %v1452 = vunpack.c.l.b16 %v1415
      %v1453 = vunpack.c.l.b16 %v1416
      %v1454 = vunpack.c.l.b16 %v1417
      %v1455 = vunpack.c.l.b16 %v1418
      %v1456 = vunpack.c.l.b16 %v1419
      %v1457 = vunpack.c.l.b16 %v1420
      %v1458 = vpack.c.b16 %v1443, %v1442
      %v1459 = vpack.c.b16 %v1445, %v1444
      %v1460 = vpack.c.b16 %v1447, %v1446
      %v1461 = vpack.c.b16 %v1449, %v1448
      %v1462 = vpack.c.b16 %v1451, %v1450
      %v1463 = vpack.c.b16 %v1453, %v1452
      %v1464 = vpack.c.b16 %v1455, %v1454
      %v1465 = vpack.c.b16 %v1457, %v1456
      %1474 = vmatpush.bf16.msra.mxu0 %v1465
      %1475 = vmatpush.bf16.msra.mxu0 %v1464
      %1476 = vmatpush.bf16.msra.mxu0 %v1463
      %1477 = vmatpush.bf16.msra.mxu0 %v1462
      %1478 = vmatpush.bf16.msra.mxu0 %v1461
      %1479 = vmatpush.bf16.msra.mxu0 %v1460
      %1480 = vmatpush.bf16.msra.mxu0 %v1459
      %1481 = vmatpush.bf16.msra.mxu0 %v1458
      %1482 = vmatmul.bf16.gmra.mxu0 %v1400
      %v1483 = vpop.f32.mrf.mxu0
      %v1484 = vadd.f32 %v1424, %v1483
      %v1485 = vpop.f32.mrf.mxu0
      %v1486 = vadd.f32 %v1424, %v1485
      %1487 = vmatmul.bf16.gmra.mxu0 %v1401
      %v1488 = vpop.f32.mrf.mxu0
      %v1489 = vadd.f32 %v1424, %v1488
      %v1490 = vpop.f32.mrf.mxu0
      %v1491 = vadd.f32 %v1424, %v1490
      %1492 = vmatmul.bf16.gmra.mxu0 %v1402
      %v1493 = vpop.f32.mrf.mxu0
      %v1494 = vadd.f32 %v1424, %v1493
      %v1495 = vpop.f32.mrf.mxu0
      %v1496 = vadd.f32 %v1424, %v1495
      %1497 = vmatmul.bf16.gmra.mxu0 %v1403
      %v1498 = vpop.f32.mrf.mxu0
      %v1499 = vadd.f32 %v1424, %v1498
      %v1500 = vpop.f32.mrf.mxu0
      %v1501 = vadd.f32 %v1424, %v1500
      %1502 = vdwg.mxu0
      %v1503 = vmax.f32 %v1484, 0.0
      %v1504 = vmax.f32 %v1486, 0.0
      %v1505 = vmax.f32 %v1489, 0.0
      %v1506 = vmax.f32 %v1491, 0.0
      %v1507 = vmax.f32 %v1494, 0.0
      %v1508 = vmax.f32 %v1496, 0.0
      %v1509 = vmax.f32 %v1499, 0.0
      %v1510 = vmax.f32 %v1501, 0.0
      %v1511 = vmul.f32 %v1503, %v578
      %v1512 = vmul.f32 %v1504, %v580
      %v1513 = vmul.f32 %v1505, %v582
      %v1514 = vmul.f32 %v1506, %v584
      %v1515 = vmul.f32 %v1507, %v586
      %v1516 = vmul.f32 %v1508, %v588
      %v1517 = vmul.f32 %v1509, %v587
      %v1518 = vmul.f32 %v1503, %v618
      %v1519 = vmul.f32 %v1504, %v620
      %v1520 = vmul.f32 %v1505, %v622
      %v1521 = vmul.f32 %v1506, %v624
      %v1522 = vmul.f32 %v1507, %v626
      %v1523 = vmul.f32 %v1508, %v628
      %v1524 = vmul.f32 %v1509, %v630
      %v1525 = vmul.f32 %v1510, %v629
      %v1526 = vmul.f32 %v1503, %v576
      %v1527 = vmul.f32 %v1504, %v578
      %v1528 = vmul.f32 %v1505, %v580
      %v1529 = vmul.f32 %v1506, %v582
      %v1530 = vmul.f32 %v1507, %v584
      %v1531 = vmul.f32 %v1508, %v586
      %v1532 = vmul.f32 %v1509, %v588
      %v1533 = vmul.f32 %v1510, %v587
      %v1534 = vmul.f32 %v1503, %v616
      %v1535 = vmul.f32 %v1504, %v618
      %v1536 = vmul.f32 %v1505, %v620
      %v1537 = vmul.f32 %v1506, %v622
      %v1538 = vmul.f32 %v1507, %v624
      %v1539 = vmul.f32 %v1508, %v626
      %v1540 = vmul.f32 %v1509, %v628
      %v1541 = vmul.f32 %v1510, %v630
      %v1542 = vmul.f32 %v1503, %v574
      %v1543 = vmul.f32 %v1504, %v576
      %v1544 = vmul.f32 %v1505, %v578
      %v1545 = vmul.f32 %v1506, %v580
      %v1546 = vmul.f32 %v1507, %v582
      %v1547 = vmul.f32 %v1508, %v584
      %v1548 = vmul.f32 %v1509, %v586
      %v1549 = vmul.f32 %v1510, %v588
      %v1550 = vmul.f32 %v1504, %v616
      %v1551 = vmul.f32 %v1505, %v618
      %v1552 = vmul.f32 %v1506, %v620
      %v1553 = vmul.f32 %v1507, %v622
      %v1554 = vmul.f32 %v1508, %v624
      %v1555 = vmul.f32 %v1509, %v626
      %v1556 = vmul.f32 %v1510, %v628
      %v1564 = vrot.slane %v1503, 1
      %v1565 = vsel %vm573, %v691, %v1564
      %v1566 = vrot.slane %v1504, 1
      %v1567 = vsel %vm573, %v1564, %v1566
      %v1568 = vrot.slane %v1505, 1
      %v1569 = vsel %vm573, %v1566, %v1568
      %v1570 = vrot.slane %v1506, 1
      %v1571 = vsel %vm573, %v1568, %v1570
      %v1572 = vrot.slane %v1507, 1
      %v1573 = vsel %vm573, %v1570, %v1572
      %v1574 = vrot.slane %v1508, 1
      %v1575 = vsel %vm573, %v1572, %v1574
      %v1576 = vrot.slane %v1509, 1
      %v1577 = vsel %vm573, %v1574, %v1576
      %1578 = vrot.lane.b32.xlu0 %v1565, 16
      %v1579 = vpop.permute.xlu0 %1578
      %1580 = vrot.lane.b32.xlu0 %v1567, 16
      %v1581 = vpop.permute.xlu0 %1580
      %1582 = vrot.lane.b32.xlu0 %v1569, 16
      %v1583 = vpop.permute.xlu0 %1582
      %1584 = vrot.lane.b32.xlu0 %v1571, 16
      %v1585 = vpop.permute.xlu0 %1584
      %1586 = vrot.lane.b32.xlu0 %v1573, 16
      %v1587 = vpop.permute.xlu0 %1586
      %1588 = vrot.lane.b32.xlu0 %v1575, 16
      %v1589 = vpop.permute.xlu0 %1588
      %1590 = vrot.lane.b32.xlu0 %v1577, 16
      %v1591 = vpop.permute.xlu0 %1590
      %1592 = vrot.lane.b32.xlu0 %v1576, 16
      %v1593 = vpop.permute.xlu0 %1592
      %v1610 = vrot.slane %v1518, 2
      %v1611 = vsel %vm742, %v743, %v1610
      %v1612 = vrot.slane %v1519, 2
      %v1613 = vsel %vm742, %v1610, %v1612
      %v1614 = vrot.slane %v1520, 2
      %v1615 = vsel %vm742, %v1612, %v1614
      %v1616 = vrot.slane %v1521, 2
      %v1617 = vsel %vm742, %v1614, %v1616
      %v1618 = vrot.slane %v1522, 2
      %v1619 = vsel %vm742, %v1616, %v1618
      %v1620 = vrot.slane %v1523, 2
      %v1621 = vsel %vm742, %v1618, %v1620
      %v1622 = vrot.slane %v1524, 2
      %v1623 = vsel %vm742, %v1620, %v1622
      %v1624 = vrot.slane %v1525, 2
      %v1625 = vsel %vm742, %v1622, %v1624
      %1626 = vrot.lane.b32.xlu0 %v1611, 32
      %v1627 = vpop.permute.xlu0 %1626
      %1628 = vrot.lane.b32.xlu0 %v1613, 32
      %v1629 = vpop.permute.xlu0 %1628
      %1630 = vrot.lane.b32.xlu0 %v1615, 32
      %v1631 = vpop.permute.xlu0 %1630
      %1632 = vrot.lane.b32.xlu0 %v1617, 32
      %v1633 = vpop.permute.xlu0 %1632
      %1634 = vrot.lane.b32.xlu0 %v1619, 32
      %v1635 = vpop.permute.xlu0 %1634
      %1636 = vrot.lane.b32.xlu0 %v1621, 32
      %v1637 = vpop.permute.xlu0 %1636
      %1638 = vrot.lane.b32.xlu0 %v1623, 32
      %v1639 = vpop.permute.xlu0 %1638
      %1640 = vrot.lane.b32.xlu0 %v1625, 32
      %v1641 = vpop.permute.xlu0 %1640
      %1658 = vrot.lane.b32.xlu0 %v1526, 48
      %v1659 = vpop.permute.xlu0 %1658
      %1660 = vrot.lane.b32.xlu0 %v1527, 48
      %v1661 = vpop.permute.xlu0 %1660
      %1662 = vrot.lane.b32.xlu0 %v1528, 48
      %v1663 = vpop.permute.xlu0 %1662
      %1664 = vrot.lane.b32.xlu0 %v1529, 48
      %v1665 = vpop.permute.xlu0 %1664
      %1666 = vrot.lane.b32.xlu0 %v1530, 48
      %v1667 = vpop.permute.xlu0 %1666
      %1668 = vrot.lane.b32.xlu0 %v1531, 48
      %v1669 = vpop.permute.xlu0 %1668
      %1670 = vrot.lane.b32.xlu0 %v1532, 48
      %v1671 = vpop.permute.xlu0 %1670
      %1672 = vrot.lane.b32.xlu0 %v1533, 48
      %v1673 = vpop.permute.xlu0 %1672
      %v1683 = vrot.slane %v1510, 1
      %v1684 = vsel %vm573, %v1576, %v1683
      %1685 = vrot.lane.b32.xlu0 %v1564, 64
      %v1686 = vpop.permute.xlu0 %1685
      %1687 = vrot.lane.b32.xlu0 %v1567, 64
      %v1688 = vpop.permute.xlu0 %1687
      %1689 = vrot.lane.b32.xlu0 %v1569, 64
      %v1690 = vpop.permute.xlu0 %1689
      %1691 = vrot.lane.b32.xlu0 %v1571, 64
      %v1692 = vpop.permute.xlu0 %1691
      %1693 = vrot.lane.b32.xlu0 %v1573, 64
      %v1694 = vpop.permute.xlu0 %1693
      %1695 = vrot.lane.b32.xlu0 %v1575, 64
      %v1696 = vpop.permute.xlu0 %1695
      %1697 = vrot.lane.b32.xlu0 %v1577, 64
      %v1698 = vpop.permute.xlu0 %1697
      %1699 = vrot.lane.b32.xlu0 %v1684, 64
      %v1700 = vpop.permute.xlu0 %1699
      %1701 = vrot.lane.b32.xlu0 %v1683, 64
      %v1702 = vpop.permute.xlu0 %1701
      %v1720 = vrot.slane %v1534, 2
      %v1721 = vrot.slane %v1535, 2
      %v1722 = vsel %vm742, %v1720, %v1721
      %v1723 = vrot.slane %v1536, 2
      %v1724 = vsel %vm742, %v1721, %v1723
      %v1725 = vrot.slane %v1537, 2
      %v1726 = vsel %vm742, %v1723, %v1725
      %v1727 = vrot.slane %v1538, 2
      %v1728 = vsel %vm742, %v1725, %v1727
      %v1729 = vrot.slane %v1539, 2
      %v1730 = vsel %vm742, %v1727, %v1729
      %v1731 = vrot.slane %v1540, 2
      %v1732 = vsel %vm742, %v1729, %v1731
      %v1733 = vrot.slane %v1541, 2
      %v1734 = vsel %vm742, %v1731, %v1733
      %v1735 = vsel %vm742, %v1733, %v877
      %1736 = vrot.lane.b32.xlu0 %v1720, 80
      %v1737 = vpop.permute.xlu0 %1736
      %1738 = vrot.lane.b32.xlu0 %v1722, 80
      %v1739 = vpop.permute.xlu0 %1738
      %1740 = vrot.lane.b32.xlu0 %v1724, 80
      %v1741 = vpop.permute.xlu0 %1740
      %1742 = vrot.lane.b32.xlu0 %v1726, 80
      %v1743 = vpop.permute.xlu0 %1742
      %1744 = vrot.lane.b32.xlu0 %v1728, 80
      %v1745 = vpop.permute.xlu0 %1744
      %1746 = vrot.lane.b32.xlu0 %v1730, 80
      %v1747 = vpop.permute.xlu0 %1746
      %1748 = vrot.lane.b32.xlu0 %v1732, 80
      %v1749 = vpop.permute.xlu0 %1748
      %1750 = vrot.lane.b32.xlu0 %v1734, 80
      %v1751 = vpop.permute.xlu0 %1750
      %1752 = vrot.lane.b32.xlu0 %v1735, 80
      %v1753 = vpop.permute.xlu0 %1752
      %1771 = vrot.lane.b32.xlu0 %v1542, 96
      %v1772 = vpop.permute.xlu0 %1771
      %1773 = vrot.lane.b32.xlu0 %v1543, 96
      %v1774 = vpop.permute.xlu0 %1773
      %1775 = vrot.lane.b32.xlu0 %v1544, 96
      %v1776 = vpop.permute.xlu0 %1775
      %1777 = vrot.lane.b32.xlu0 %v1545, 96
      %v1778 = vpop.permute.xlu0 %1777
      %1779 = vrot.lane.b32.xlu0 %v1546, 96
      %v1780 = vpop.permute.xlu0 %1779
      %1781 = vrot.lane.b32.xlu0 %v1547, 96
      %v1782 = vpop.permute.xlu0 %1781
      %1783 = vrot.lane.b32.xlu0 %v1548, 96
      %v1784 = vpop.permute.xlu0 %1783
      %1785 = vrot.lane.b32.xlu0 %v1549, 96
      %v1786 = vpop.permute.xlu0 %1785
      %v1795 = vsel %vm573, %v1683, %v691
      %1796 = vrot.lane.b32.xlu0 %v1566, 112
      %v1797 = vpop.permute.xlu0 %1796
      %1798 = vrot.lane.b32.xlu0 %v1569, 112
      %v1799 = vpop.permute.xlu0 %1798
      %1800 = vrot.lane.b32.xlu0 %v1571, 112
      %v1801 = vpop.permute.xlu0 %1800
      %1802 = vrot.lane.b32.xlu0 %v1573, 112
      %v1803 = vpop.permute.xlu0 %1802
      %1804 = vrot.lane.b32.xlu0 %v1575, 112
      %v1805 = vpop.permute.xlu0 %1804
      %1806 = vrot.lane.b32.xlu0 %v1577, 112
      %v1807 = vpop.permute.xlu0 %1806
      %1808 = vrot.lane.b32.xlu0 %v1684, 112
      %v1809 = vpop.permute.xlu0 %1808
      %1810 = vrot.lane.b32.xlu0 %v1795, 112
      %v1811 = vpop.permute.xlu0 %1810
      %v1827 = vrot.slane %v1550, 2
      %v1828 = vrot.slane %v1551, 2
      %v1829 = vsel %vm742, %v1827, %v1828
      %v1830 = vrot.slane %v1552, 2
      %v1831 = vsel %vm742, %v1828, %v1830
      %v1832 = vrot.slane %v1553, 2
      %v1833 = vsel %vm742, %v1830, %v1832
      %v1834 = vrot.slane %v1554, 2
      %v1835 = vsel %vm742, %v1832, %v1834
      %v1836 = vrot.slane %v1555, 2
      %v1837 = vsel %vm742, %v1834, %v1836
      %v1838 = vrot.slane %v1556, 2
      %v1839 = vsel %vm742, %v1836, %v1838
      %v1840 = vsel %vm742, %v1838, %v991
      %v1849 = vsel %vm261, %v599, %v1579
      %v1850 = vsel %vm261, %v1511, %v1581
      %v1851 = vsel %vm261, %v1512, %v1583
      %v1852 = vsel %vm261, %v1513, %v1585
      %v1853 = vsel %vm261, %v1514, %v1587
      %v1854 = vsel %vm261, %v1515, %v1589
      %v1855 = vsel %vm261, %v1516, %v1591
      %v1856 = vsel %vm261, %v1517, %v1593
      %v1857 = vsel %vm1012, %v1849, %v1627
      %v1858 = vsel %vm1012, %v1850, %v1629
      %v1859 = vsel %vm1012, %v1851, %v1631
      %v1860 = vsel %vm1012, %v1852, %v1633
      %v1861 = vsel %vm1012, %v1853, %v1635
      %v1862 = vsel %vm1012, %v1854, %v1637
      %v1863 = vsel %vm1012, %v1855, %v1639
      %v1864 = vsel %vm1012, %v1856, %v1641
      %v1865 = vsel %vm1022, %v1857, %v1659
      %v1866 = vsel %vm1022, %v1858, %v1661
      %v1867 = vsel %vm1022, %v1859, %v1663
      %v1868 = vsel %vm1022, %v1860, %v1665
      %v1869 = vsel %vm1022, %v1861, %v1667
      %v1870 = vsel %vm1022, %v1862, %v1669
      %v1871 = vsel %vm1022, %v1863, %v1671
      %v1872 = vsel %vm1022, %v1864, %v1673
      %v1873 = vsel %vm1032, %v1023, %v1686
      %v1874 = vsel %vm1032, %v1865, %v1688
      %v1875 = vsel %vm1032, %v1866, %v1690
      %v1876 = vsel %vm1032, %v1867, %v1692
      %v1877 = vsel %vm1032, %v1868, %v1694
      %v1878 = vsel %vm1032, %v1869, %v1696
      %v1879 = vsel %vm1032, %v1870, %v1698
      %v1880 = vsel %vm1032, %v1871, %v1700
      %v1881 = vsel %vm1032, %v1872, %v1702
      %v1882 = vsel %vm1042, %v1873, %v1737
      %v1883 = vsel %vm1042, %v1874, %v1739
      %v1884 = vsel %vm1042, %v1875, %v1741
      %v1885 = vsel %vm1042, %v1876, %v1743
      %v1886 = vsel %vm1042, %v1877, %v1745
      %v1887 = vsel %vm1042, %v1878, %v1747
      %v1888 = vsel %vm1042, %v1879, %v1749
      %v1889 = vsel %vm1042, %v1880, %v1751
      %v1890 = vsel %vm1042, %v1881, %v1753
      %v1891 = vsel %vm1052, %v1882, %v1772
      %v1892 = vsel %vm1052, %v1883, %v1774
      %v1893 = vsel %vm1052, %v1884, %v1776
      %v1894 = vsel %vm1052, %v1885, %v1778
      %v1895 = vsel %vm1052, %v1886, %v1780
      %v1896 = vsel %vm1052, %v1887, %v1782
      %v1897 = vsel %vm1052, %v1888, %v1784
      %v1898 = vsel %vm1052, %v1889, %v1786
      %v1899 = vsel %vm1052, %v1890, %v932
      %v1900 = vsel %vm1062, %v1891, %v1797
      %v1901 = vsel %vm1062, %v1892, %v1799
      %v1902 = vsel %vm1062, %v1893, %v1801
      %v1903 = vsel %vm1062, %v1894, %v1803
      %v1904 = vsel %vm1062, %v1895, %v1805
      %v1905 = vsel %vm1062, %v1896, %v1807
      %v1906 = vsel %vm1062, %v1897, %v1809
      %v1907 = vsel %vm1062, %v1898, %v1811
      %v1908 = vsel %vm1062, %v1899, %v960
      %v1909 = vpack.c.bf16 %v1901, %v1900
      %v1910 = vpack.c.bf16 %v1829, %v1827
      %v1911 = vpack.c.bf16 %v1903, %v1902
      %v1912 = vpack.c.bf16 %v1833, %v1831
      %v1913 = vpack.c.bf16 %v1905, %v1904
      %v1914 = vpack.c.bf16 %v1837, %v1835
      %v1915 = vpack.c.bf16 %v1907, %v1906
      %v1916 = vpack.c.bf16 %v1840, %v1839
      %v1917 = vpack.c.bf16 %v1908, %v1908
      %s1918 = scalar_lea.vmem %s5, 72
      %v1919 = vld [vmem:[%s1918] sm:$0xf]
      %v1920 = vld [vmem:[%s1918 + $0x4] sm:$0xf]
      %v1921 = vld [vmem:[%s1918 + $0x8] sm:$0xf]
      %v1922 = vld [vmem:[%s1918 + $0xc] sm:$0xf]
      %v1923 = vld [vmem:[%s1918 + $0x10] sm:$0xf]
      %v1924 = vld [vmem:[%s1918 + $0x14] sm:$0xf]
      %v1925 = vld [vmem:[%s1918 + $0x18] sm:$0xf]
      %v1926 = vld [vmem:[%s1918 + $0x1c] sm:$0xf]
      %v1927 = vld [vmem:[%s1918 + $0x20] sm:$0xf]
      %v1928 = vld [vmem:[%s1918 + $0x24] sm:$0xf]
      %v1929 = vld [vmem:[%s1918 + $0x28] sm:$0xf]
      %v1930 = vld [vmem:[%s1918 + $0x2c] sm:$0xf]
      %v1931 = vld [vmem:[%s1918 + $0x30] sm:$0xf]
      %v1932 = vld [vmem:[%s1918 + $0x34] sm:$0xf]
      %v1933 = vld [vmem:[%s1918 + $0x38] sm:$0xf]
      %v1934 = vld [vmem:[%s1918 + $0x3c] sm:$0xf]
      %v1935 = vld [vmem:[%s1918 + $0x40] sm:$0xf]
      %v1936 = vld [vmem:[%s1918 + $0x44] sm:$0xf]
      %v1938 = vshrl.u32 %v1909, 16
      %v1940 = vrot.slane %v1938, 3
      %v1941 = vshll.u32 %v1909, 16
      %v1943 = vrot.slane %v1941, 4
      %v1944 = vor.u32 %v1940, %v1943
      %v1946 = vshrl.u32 %v1911, 16
      %v1948 = vrot.slane %v1946, 3
      %v1949 = vshll.u32 %v1911, 16
      %v1951 = vrot.slane %v1949, 4
      %v1952 = vor.u32 %v1948, %v1951
      %v1953 = vsel %vm1100, %v1944, %v1952
      %v1955 = vshrl.u32 %v1910, 16
      %v1957 = vrot.slane %v1955, 3
      %v1958 = vshll.u32 %v1910, 16
      %v1960 = vrot.slane %v1958, 4
      %v1961 = vor.u32 %v1957, %v1960
      %v1963 = vshrl.u32 %v1912, 16
      %v1965 = vrot.slane %v1963, 3
      %v1966 = vshll.u32 %v1912, 16
      %v1968 = vrot.slane %v1966, 4
      %v1969 = vor.u32 %v1965, %v1968
      %v1970 = vsel %vm1100, %v1961, %v1969
      %v1972 = vshrl.u32 %v1913, 16
      %v1974 = vrot.slane %v1972, 3
      %v1975 = vshll.u32 %v1913, 16
      %v1977 = vrot.slane %v1975, 4
      %v1978 = vor.u32 %v1974, %v1977
      %v1979 = vsel %vm1100, %v1952, %v1978
      %v1981 = vshrl.u32 %v1914, 16
      %v1983 = vrot.slane %v1981, 3
      %v1984 = vshll.u32 %v1914, 16
      %v1986 = vrot.slane %v1984, 4
      %v1987 = vor.u32 %v1983, %v1986
      %v1988 = vsel %vm1100, %v1969, %v1987
      %v1990 = vshrl.u32 %v1915, 16
      %v1992 = vrot.slane %v1990, 3
      %v1993 = vshll.u32 %v1915, 16
      %v1995 = vrot.slane %v1993, 4
      %v1996 = vor.u32 %v1992, %v1995
      %v1997 = vsel %vm1100, %v1978, %v1996
      %v1999 = vshrl.u32 %v1916, 16
      %v2001 = vrot.slane %v1999, 3
      %v2002 = vshll.u32 %v1916, 16
      %v2004 = vrot.slane %v2002, 4
      %v2005 = vor.u32 %v2001, %v2004
      %v2006 = vsel %vm1100, %v1987, %v2005
      %v2008 = vshrl.u32 %v1917, 16
      %v2010 = vrot.slane %v2008, 3
      %v2011 = vshll.u32 %v1917, 16
      %v2013 = vrot.slane %v2011, 4
      %v2014 = vor.u32 %v2010, %v2013
      %v2015 = vsel %vm1100, %v1996, %v2014
      %v2016 = vsel %vm1100, %v2005, %v1187
      %v2039 = vunpack.c.l.b16 %v1919
      %v2040 = vunpack.c.l.b16 %v1920
      %v2041 = vunpack.c.l.b16 %v1921
      %v2042 = vunpack.c.l.b16 %v1922
      %v2043 = vunpack.c.l.b16 %v1923
      %v2044 = vunpack.c.l.b16 %v1924
      %v2045 = vunpack.c.l.b16 %v1925
      %v2046 = vunpack.c.l.b16 %v1926
      %v2047 = vunpack.c.l.b16 %v1927
      %v2048 = vunpack.c.l.b16 %v1928
      %v2049 = vunpack.c.l.b16 %v1929
      %v2050 = vunpack.c.l.b16 %v1930
      %v2051 = vunpack.c.l.b16 %v1931
      %v2052 = vunpack.c.l.b16 %v1932
      %v2053 = vunpack.c.l.b16 %v1933
      %v2054 = vunpack.c.l.b16 %v1934
      %v2055 = vunpack.c.l.b16 %v1935
      %v2056 = vunpack.c.l.b16 %v1936
      %v2057 = vpack.c.b16 %v2040, %v2039
      %v2058 = vpack.c.b16 %v2042, %v2041
      %v2059 = vpack.c.b16 %v2044, %v2043
      %v2060 = vpack.c.b16 %v2046, %v2045
      %v2061 = vpack.c.b16 %v2048, %v2047
      %v2062 = vpack.c.b16 %v2050, %v2049
      %v2063 = vpack.c.b16 %v2052, %v2051
      %v2064 = vpack.c.b16 %v2054, %v2053
      %v2065 = vpack.c.b16 %v2056, %v2055
      %v2076 = vsel %vm261, %v1970, 0
      %v2079 = vsel %vm261, %v1988, 0
      %v2082 = vsel %vm261, %v2006, 0
      %v2085 = vsel %vm261, %v2016, 0
      %2087 = vmatpush.bf16.msra.mxu0 %v2064
      %2088 = vmatpush.bf16.msra.mxu0 %v2063
      %2089 = vmatpush.bf16.msra.mxu0 %v2062
      %2090 = vmatpush.bf16.msra.mxu0 %v2061
      %2091 = vmatpush.bf16.msra.mxu0 %v2060
      %2092 = vmatpush.bf16.msra.mxu0 %v2059
      %2093 = vmatpush.bf16.msra.mxu0 %v2058
      %2094 = vmatpush.bf16.msra.mxu0 %v2057
      %2095 = vmatmul.bf16.gmra.mxu0 %v1953
      %v2096 = vpop.f32.mrf.mxu0
      %v2097 = vadd.f32 0.0, %v2096
      %v2098 = vpop.f32.mrf.mxu0
      %v2099 = vadd.f32 0.0, %v2098
      %2100 = vmatmul.bf16.gmra.mxu0 %v1979
      %v2101 = vpop.f32.mrf.mxu0
      %v2102 = vadd.f32 0.0, %v2101
      %v2103 = vpop.f32.mrf.mxu0
      %v2104 = vadd.f32 0.0, %v2103
      %2105 = vmatmul.bf16.gmra.mxu0 %v1997
      %v2106 = vpop.f32.mrf.mxu0
      %v2107 = vadd.f32 0.0, %v2106
      %v2108 = vpop.f32.mrf.mxu0
      %v2109 = vadd.f32 0.0, %v2108
      %2110 = vmatmul.bf16.gmra.mxu0 %v2015
      %v2111 = vpop.f32.mrf.mxu0
      %v2112 = vadd.f32 0.0, %v2111
      %v2113 = vpop.f32.mrf.mxu0
      %v2114 = vadd.f32 0.0, %v2113
      %2115 = vdwg.mxu0
      %2116 = vmatpush.bf16.msra.mxu0 0
      %2117 = vmatpush.bf16.msra.mxu0 0
      %2118 = vmatpush.bf16.msra.mxu0 0
      %2119 = vmatpush.bf16.msra.mxu0 0
      %2120 = vmatpush.bf16.msra.mxu0 0
      %2121 = vmatpush.bf16.msra.mxu0 0
      %2122 = vmatpush.bf16.msra.mxu0 0
      %2123 = vmatpush.bf16.msra.mxu0 %v2065
      %2124 = vmatmul.bf16.gmra.mxu0 %v2076
      %v2125 = vpop.f32.mrf.mxu0
      %v2126 = vadd.f32 %v2097, %v2125
      %v2127 = vpop.f32.mrf.mxu0
      %v2128 = vadd.f32 %v2099, %v2127
      %2129 = vmatmul.bf16.gmra.mxu0 %v2079
      %v2130 = vpop.f32.mrf.mxu0
      %v2131 = vadd.f32 %v2102, %v2130
      %v2132 = vpop.f32.mrf.mxu0
      %v2133 = vadd.f32 %v2104, %v2132
      %2134 = vmatmul.bf16.gmra.mxu0 %v2082
      %v2135 = vpop.f32.mrf.mxu0
      %v2136 = vadd.f32 %v2107, %v2135
      %v2137 = vpop.f32.mrf.mxu0
      %v2138 = vadd.f32 %v2109, %v2137
      %2139 = vmatmul.bf16.gmra.mxu0 %v2085
      %v2140 = vpop.f32.mrf.mxu0
      %v2141 = vadd.f32 %v2112, %v2140
      %v2142 = vpop.f32.mrf.mxu0
      %v2143 = vadd.f32 %v2114, %v2142
      %2144 = vdwg.mxu0
      %2153 = vrot.lane.b32.xlu0 %v2126, 24
      %v2154 = vpop.permute.xlu0 %2153
      %2155 = vrot.lane.b32.xlu0 %v2128, 24
      %v2156 = vpop.permute.xlu0 %2155
      %2157 = vrot.lane.b32.xlu0 %v2131, 24
      %v2158 = vpop.permute.xlu0 %2157
      %2159 = vrot.lane.b32.xlu0 %v2133, 24
      %v2160 = vpop.permute.xlu0 %2159
      %2161 = vrot.lane.b32.xlu0 %v2136, 24
      %v2162 = vpop.permute.xlu0 %2161
      %2163 = vrot.lane.b32.xlu0 %v2138, 24
      %v2164 = vpop.permute.xlu0 %2163
      %2165 = vrot.lane.b32.xlu0 %v2141, 24
      %v2166 = vpop.permute.xlu0 %2165
      %2167 = vrot.lane.b32.xlu0 %v2143, 24
      %v2168 = vpop.permute.xlu0 %2167
      %vm2177 = vcmask 261312
      %2178 = vst.msk [vmem:[%s251] sm:$0xff] %vm2177, %v2154
      %2179 = vst.msk [vmem:[%s251 + $0x8] sm:$0xff] %vm2177, %v2156
      %2180 = vst.msk [vmem:[%s251 + $0x10] sm:$0xff] %vm2177, %v2158
      %2181 = vst.msk [vmem:[%s251 + $0x18] sm:$0xff] %vm2177, %v2160
      %2182 = vst.msk [vmem:[%s251 + $0x20] sm:$0xff] %vm2177, %v2162
      %2183 = vst.msk [vmem:[%s251 + $0x28] sm:$0xff] %vm2177, %v2164
      %2184 = vst.msk [vmem:[%s251 + $0x30] sm:$0xff] %vm2177, %v2166
      %2185 = vst.msk [vmem:[%s251 + $0x38] sm:$0xff] %vm2177, %v2168
      %v2186 = vld [vmem:[%s251] sm:$0xff]
      %v2187 = vld [vmem:[%s251 + $0x8] sm:$0xff]
      %v2188 = vld [vmem:[%s251 + $0x10] sm:$0xff]
      %v2189 = vld [vmem:[%s251 + $0x18] sm:$0xff]
      %v2190 = vld [vmem:[%s251 + $0x20] sm:$0xff]
      %v2191 = vld [vmem:[%s251 + $0x28] sm:$0xff]
      %v2192 = vld [vmem:[%s251 + $0x30] sm:$0xff]
      %v2193 = vld [vmem:[%s251 + $0x38] sm:$0xff]
      %s2194 = scalar_lea.vmem %s1, 2
      %v2195 = vld [vmem:[%s2194] sm:$0x1]
      %v2197 = vperm.slane %v2195, 0
      %v2199 = vmul.f32 %v2186, %v2197
      %v2200 = vmul.f32 %v2187, %v2197
      %v2201 = vmul.f32 %v2188, %v2197
      %v2202 = vmul.f32 %v2189, %v2197
      %v2203 = vmul.f32 %v2190, %v2197
      %v2204 = vmul.f32 %v2191, %v2197
      %v2205 = vmul.f32 %v2192, %v2197
      %v2206 = vmul.f32 %v2193, %v2197
      %s2207 = scalar_lea.vmem %s2, 2
      %v2208 = vld [vmem:[%s2207] sm:$0x1]
      %v2210 = vperm.slane %v2208, 0
      %v2212 = vadd.f32 %v2199, %v2210
      %v2213 = vadd.f32 %v2200, %v2210
      %v2214 = vadd.f32 %v2201, %v2210
      %v2215 = vadd.f32 %v2202, %v2210
      %v2216 = vadd.f32 %v2203, %v2210
      %v2217 = vadd.f32 %v2204, %v2210
      %v2218 = vadd.f32 %v2205, %v2210
      %v2219 = vadd.f32 %v2206, %v2210
      %v2220 = vmax.f32 %v2212, 0.0
      %v2221 = vmax.f32 %v2213, 0.0
      %v2222 = vmax.f32 %v2214, 0.0
      %v2223 = vmax.f32 %v2215, 0.0
      %v2224 = vmax.f32 %v2216, 0.0
      %v2225 = vmax.f32 %v2217, 0.0
      %v2226 = vmax.f32 %v2218, 0.0
      %v2227 = vmax.f32 %v2219, 0.0
      %v2228 = vpack.c.bf16 %v2221, %v2220
      %v2229 = vpack.c.bf16 %v2223, %v2222
      %v2230 = vpack.c.bf16 %v2225, %v2224
      %v2231 = vpack.c.bf16 %v2227, %v2226
      %s2232 = scalar_lea.vmem %s3, 128
      %v2233 = vld [vmem:[%s2232] sm:$0xf]
      %v2234 = vld [vmem:[%s2232 + $0x4] sm:$0xf]
      %v2235 = vld [vmem:[%s2232 + $0x8] sm:$0xf]
      %v2236 = vld [vmem:[%s2232 + $0xc] sm:$0xf]
      %v2237 = vld [vmem:[%s2232 + $0x10] sm:$0xf]
      %v2238 = vld [vmem:[%s2232 + $0x14] sm:$0xf]
      %v2239 = vld [vmem:[%s2232 + $0x18] sm:$0xf]
      %v2240 = vld [vmem:[%s2232 + $0x1c] sm:$0xf]
      %v2241 = vld [vmem:[%s2232 + $0x20] sm:$0xf]
      %v2242 = vld [vmem:[%s2232 + $0x24] sm:$0xf]
      %v2243 = vld [vmem:[%s2232 + $0x28] sm:$0xf]
      %v2244 = vld [vmem:[%s2232 + $0x2c] sm:$0xf]
      %v2245 = vld [vmem:[%s2232 + $0x30] sm:$0xf]
      %v2246 = vld [vmem:[%s2232 + $0x34] sm:$0xf]
      %v2247 = vld [vmem:[%s2232 + $0x38] sm:$0xf]
      %v2248 = vld [vmem:[%s2232 + $0x3c] sm:$0xf]
      %s2249 = scalar_lea.vmem %s4, 2
      %v2250 = vld [vmem:[%s2249] sm:$0x1]
      %v2252 = vperm.slane %v2250, 0
      %v2270 = vunpack.c.l.b16 %v2233
      %v2271 = vunpack.c.l.b16 %v2234
      %v2272 = vunpack.c.l.b16 %v2235
      %v2273 = vunpack.c.l.b16 %v2236
      %v2274 = vunpack.c.l.b16 %v2237
      %v2275 = vunpack.c.l.b16 %v2238
      %v2276 = vunpack.c.l.b16 %v2239
      %v2277 = vunpack.c.l.b16 %v2240
      %v2278 = vunpack.c.l.b16 %v2241
      %v2279 = vunpack.c.l.b16 %v2242
      %v2280 = vunpack.c.l.b16 %v2243
      %v2281 = vunpack.c.l.b16 %v2244
      %v2282 = vunpack.c.l.b16 %v2245
      %v2283 = vunpack.c.l.b16 %v2246
      %v2284 = vunpack.c.l.b16 %v2247
      %v2285 = vunpack.c.l.b16 %v2248
      %v2286 = vpack.c.b16 %v2271, %v2270
      %v2287 = vpack.c.b16 %v2273, %v2272
      %v2288 = vpack.c.b16 %v2275, %v2274
      %v2289 = vpack.c.b16 %v2277, %v2276
      %v2290 = vpack.c.b16 %v2279, %v2278
      %v2291 = vpack.c.b16 %v2281, %v2280
      %v2292 = vpack.c.b16 %v2283, %v2282
      %v2293 = vpack.c.b16 %v2285, %v2284
      %2302 = vmatpush.bf16.msra.mxu0 %v2293
      %2303 = vmatpush.bf16.msra.mxu0 %v2292
      %2304 = vmatpush.bf16.msra.mxu0 %v2291
      %2305 = vmatpush.bf16.msra.mxu0 %v2290
      %2306 = vmatpush.bf16.msra.mxu0 %v2289
      %2307 = vmatpush.bf16.msra.mxu0 %v2288
      %2308 = vmatpush.bf16.msra.mxu0 %v2287
      %2309 = vmatpush.bf16.msra.mxu0 %v2286
      %2310 = vmatmul.bf16.gmra.mxu0 %v2228
      %v2311 = vpop.f32.mrf.mxu0
      %v2312 = vadd.f32 %v2252, %v2311
      %v2313 = vpop.f32.mrf.mxu0
      %v2314 = vadd.f32 %v2252, %v2313
      %2315 = vmatmul.bf16.gmra.mxu0 %v2229
      %v2316 = vpop.f32.mrf.mxu0
      %v2317 = vadd.f32 %v2252, %v2316
      %v2318 = vpop.f32.mrf.mxu0
      %v2319 = vadd.f32 %v2252, %v2318
      %2320 = vmatmul.bf16.gmra.mxu0 %v2230
      %v2321 = vpop.f32.mrf.mxu0
      %v2322 = vadd.f32 %v2252, %v2321
      %v2323 = vpop.f32.mrf.mxu0
      %v2324 = vadd.f32 %v2252, %v2323
      %2325 = vmatmul.bf16.gmra.mxu0 %v2231
      %v2326 = vpop.f32.mrf.mxu0
      %v2327 = vadd.f32 %v2252, %v2326
      %v2328 = vpop.f32.mrf.mxu0
      %v2329 = vadd.f32 %v2252, %v2328
      %2330 = vdwg.mxu0
      %v2331 = vmax.f32 %v2312, 0.0
      %v2332 = vmax.f32 %v2314, 0.0
      %v2333 = vmax.f32 %v2317, 0.0
      %v2334 = vmax.f32 %v2319, 0.0
      %v2335 = vmax.f32 %v2322, 0.0
      %v2336 = vmax.f32 %v2324, 0.0
      %v2337 = vmax.f32 %v2327, 0.0
      %v2338 = vmax.f32 %v2329, 0.0
      %v2339 = vmul.f32 %v2331, %v578
      %v2340 = vmul.f32 %v2332, %v580
      %v2341 = vmul.f32 %v2333, %v582
      %v2342 = vmul.f32 %v2334, %v584
      %v2343 = vmul.f32 %v2335, %v586
      %v2344 = vmul.f32 %v2336, %v588
      %v2345 = vmul.f32 %v2337, %v587
      %v2346 = vmul.f32 %v2331, %v618
      %v2347 = vmul.f32 %v2332, %v620
      %v2348 = vmul.f32 %v2333, %v622
      %v2349 = vmul.f32 %v2334, %v624
      %v2350 = vmul.f32 %v2335, %v626
      %v2351 = vmul.f32 %v2336, %v628
      %v2352 = vmul.f32 %v2337, %v630
      %v2353 = vmul.f32 %v2338, %v629
      %v2354 = vmul.f32 %v2331, %v576
      %v2355 = vmul.f32 %v2332, %v578
      %v2356 = vmul.f32 %v2333, %v580
      %v2357 = vmul.f32 %v2334, %v582
      %v2358 = vmul.f32 %v2335, %v584
      %v2359 = vmul.f32 %v2336, %v586
      %v2360 = vmul.f32 %v2337, %v588
      %v2361 = vmul.f32 %v2338, %v587
      %v2362 = vmul.f32 %v2331, %v616
      %v2363 = vmul.f32 %v2332, %v618
      %v2364 = vmul.f32 %v2333, %v620
      %v2365 = vmul.f32 %v2334, %v622
      %v2366 = vmul.f32 %v2335, %v624
      %v2367 = vmul.f32 %v2336, %v626
      %v2368 = vmul.f32 %v2337, %v628
      %v2369 = vmul.f32 %v2338, %v630
      %v2370 = vmul.f32 %v2331, %v574
      %v2371 = vmul.f32 %v2332, %v576
      %v2372 = vmul.f32 %v2333, %v578
      %v2373 = vmul.f32 %v2334, %v580
      %v2374 = vmul.f32 %v2335, %v582
      %v2375 = vmul.f32 %v2336, %v584
      %v2376 = vmul.f32 %v2337, %v586
      %v2377 = vmul.f32 %v2338, %v588
      %v2378 = vmul.f32 %v2332, %v616
      %v2379 = vmul.f32 %v2333, %v618
      %v2380 = vmul.f32 %v2334, %v620
      %v2381 = vmul.f32 %v2335, %v622
      %v2382 = vmul.f32 %v2336, %v624
      %v2383 = vmul.f32 %v2337, %v626
      %v2384 = vmul.f32 %v2338, %v628
      %v2392 = vrot.slane %v2331, 1
      %v2393 = vsel %vm573, %v691, %v2392
      %v2394 = vrot.slane %v2332, 1
      %v2395 = vsel %vm573, %v2392, %v2394
      %v2396 = vrot.slane %v2333, 1
      %v2397 = vsel %vm573, %v2394, %v2396
      %v2398 = vrot.slane %v2334, 1
      %v2399 = vsel %vm573, %v2396, %v2398
      %v2400 = vrot.slane %v2335, 1
      %v2401 = vsel %vm573, %v2398, %v2400
      %v2402 = vrot.slane %v2336, 1
      %v2403 = vsel %vm573, %v2400, %v2402
      %v2404 = vrot.slane %v2337, 1
      %v2405 = vsel %vm573, %v2402, %v2404
      %2406 = vrot.lane.b32.xlu0 %v2393, 16
      %v2407 = vpop.permute.xlu0 %2406
      %2408 = vrot.lane.b32.xlu0 %v2395, 16
      %v2409 = vpop.permute.xlu0 %2408
      %2410 = vrot.lane.b32.xlu0 %v2397, 16
      %v2411 = vpop.permute.xlu0 %2410
      %2412 = vrot.lane.b32.xlu0 %v2399, 16
      %v2413 = vpop.permute.xlu0 %2412
      %2414 = vrot.lane.b32.xlu0 %v2401, 16
      %v2415 = vpop.permute.xlu0 %2414
      %2416 = vrot.lane.b32.xlu0 %v2403, 16
      %v2417 = vpop.permute.xlu0 %2416
      %2418 = vrot.lane.b32.xlu0 %v2405, 16
      %v2419 = vpop.permute.xlu0 %2418
      %2420 = vrot.lane.b32.xlu0 %v2404, 16
      %v2421 = vpop.permute.xlu0 %2420
      %v2438 = vrot.slane %v2346, 2
      %v2439 = vsel %vm742, %v743, %v2438
      %v2440 = vrot.slane %v2347, 2
      %v2441 = vsel %vm742, %v2438, %v2440
      %v2442 = vrot.slane %v2348, 2
      %v2443 = vsel %vm742, %v2440, %v2442
      %v2444 = vrot.slane %v2349, 2
      %v2445 = vsel %vm742, %v2442, %v2444
      %v2446 = vrot.slane %v2350, 2
      %v2447 = vsel %vm742, %v2444, %v2446
      %v2448 = vrot.slane %v2351, 2
      %v2449 = vsel %vm742, %v2446, %v2448
      %v2450 = vrot.slane %v2352, 2
      %v2451 = vsel %vm742, %v2448, %v2450
      %v2452 = vrot.slane %v2353, 2
      %v2453 = vsel %vm742, %v2450, %v2452
      %2454 = vrot.lane.b32.xlu0 %v2439, 32
      %v2455 = vpop.permute.xlu0 %2454
      %2456 = vrot.lane.b32.xlu0 %v2441, 32
      %v2457 = vpop.permute.xlu0 %2456
      %2458 = vrot.lane.b32.xlu0 %v2443, 32
      %v2459 = vpop.permute.xlu0 %2458
      %2460 = vrot.lane.b32.xlu0 %v2445, 32
      %v2461 = vpop.permute.xlu0 %2460
      %2462 = vrot.lane.b32.xlu0 %v2447, 32
      %v2463 = vpop.permute.xlu0 %2462
      %2464 = vrot.lane.b32.xlu0 %v2449, 32
      %v2465 = vpop.permute.xlu0 %2464
      %2466 = vrot.lane.b32.xlu0 %v2451, 32
      %v2467 = vpop.permute.xlu0 %2466
      %2468 = vrot.lane.b32.xlu0 %v2453, 32
      %v2469 = vpop.permute.xlu0 %2468
      %2486 = vrot.lane.b32.xlu0 %v2354, 48
      %v2487 = vpop.permute.xlu0 %2486
      %2488 = vrot.lane.b32.xlu0 %v2355, 48
      %v2489 = vpop.permute.xlu0 %2488
      %2490 = vrot.lane.b32.xlu0 %v2356, 48
      %v2491 = vpop.permute.xlu0 %2490
      %2492 = vrot.lane.b32.xlu0 %v2357, 48
      %v2493 = vpop.permute.xlu0 %2492
      %2494 = vrot.lane.b32.xlu0 %v2358, 48
      %v2495 = vpop.permute.xlu0 %2494
      %2496 = vrot.lane.b32.xlu0 %v2359, 48
      %v2497 = vpop.permute.xlu0 %2496
      %2498 = vrot.lane.b32.xlu0 %v2360, 48
      %v2499 = vpop.permute.xlu0 %2498
      %2500 = vrot.lane.b32.xlu0 %v2361, 48
      %v2501 = vpop.permute.xlu0 %2500
      %v2511 = vrot.slane %v2338, 1
      %v2512 = vsel %vm573, %v2404, %v2511
      %2513 = vrot.lane.b32.xlu0 %v2392, 64
      %v2514 = vpop.permute.xlu0 %2513
      %2515 = vrot.lane.b32.xlu0 %v2395, 64
      %v2516 = vpop.permute.xlu0 %2515
      %2517 = vrot.lane.b32.xlu0 %v2397, 64
      %v2518 = vpop.permute.xlu0 %2517
      %2519 = vrot.lane.b32.xlu0 %v2399, 64
      %v2520 = vpop.permute.xlu0 %2519
      %2521 = vrot.lane.b32.xlu0 %v2401, 64
      %v2522 = vpop.permute.xlu0 %2521
      %2523 = vrot.lane.b32.xlu0 %v2403, 64
      %v2524 = vpop.permute.xlu0 %2523
      %2525 = vrot.lane.b32.xlu0 %v2405, 64
      %v2526 = vpop.permute.xlu0 %2525
      %2527 = vrot.lane.b32.xlu0 %v2512, 64
      %v2528 = vpop.permute.xlu0 %2527
      %2529 = vrot.lane.b32.xlu0 %v2511, 64
      %v2530 = vpop.permute.xlu0 %2529
      %v2548 = vrot.slane %v2362, 2
      %v2549 = vrot.slane %v2363, 2
      %v2550 = vsel %vm742, %v2548, %v2549
      %v2551 = vrot.slane %v2364, 2
      %v2552 = vsel %vm742, %v2549, %v2551
      %v2553 = vrot.slane %v2365, 2
      %v2554 = vsel %vm742, %v2551, %v2553
      %v2555 = vrot.slane %v2366, 2
      %v2556 = vsel %vm742, %v2553, %v2555
      %v2557 = vrot.slane %v2367, 2
      %v2558 = vsel %vm742, %v2555, %v2557
      %v2559 = vrot.slane %v2368, 2
      %v2560 = vsel %vm742, %v2557, %v2559
      %v2561 = vrot.slane %v2369, 2
      %v2562 = vsel %vm742, %v2559, %v2561
      %v2563 = vsel %vm742, %v2561, %v877
      %2564 = vrot.lane.b32.xlu0 %v2548, 80
      %v2565 = vpop.permute.xlu0 %2564
      %2566 = vrot.lane.b32.xlu0 %v2550, 80
      %v2567 = vpop.permute.xlu0 %2566
      %2568 = vrot.lane.b32.xlu0 %v2552, 80
      %v2569 = vpop.permute.xlu0 %2568
      %2570 = vrot.lane.b32.xlu0 %v2554, 80
      %v2571 = vpop.permute.xlu0 %2570
      %2572 = vrot.lane.b32.xlu0 %v2556, 80
      %v2573 = vpop.permute.xlu0 %2572
      %2574 = vrot.lane.b32.xlu0 %v2558, 80
      %v2575 = vpop.permute.xlu0 %2574
      %2576 = vrot.lane.b32.xlu0 %v2560, 80
      %v2577 = vpop.permute.xlu0 %2576
      %2578 = vrot.lane.b32.xlu0 %v2562, 80
      %v2579 = vpop.permute.xlu0 %2578
      %2580 = vrot.lane.b32.xlu0 %v2563, 80
      %v2581 = vpop.permute.xlu0 %2580
      %2599 = vrot.lane.b32.xlu0 %v2370, 96
      %v2600 = vpop.permute.xlu0 %2599
      %2601 = vrot.lane.b32.xlu0 %v2371, 96
      %v2602 = vpop.permute.xlu0 %2601
      %2603 = vrot.lane.b32.xlu0 %v2372, 96
      %v2604 = vpop.permute.xlu0 %2603
      %2605 = vrot.lane.b32.xlu0 %v2373, 96
      %v2606 = vpop.permute.xlu0 %2605
      %2607 = vrot.lane.b32.xlu0 %v2374, 96
      %v2608 = vpop.permute.xlu0 %2607
      %2609 = vrot.lane.b32.xlu0 %v2375, 96
      %v2610 = vpop.permute.xlu0 %2609
      %2611 = vrot.lane.b32.xlu0 %v2376, 96
      %v2612 = vpop.permute.xlu0 %2611
      %2613 = vrot.lane.b32.xlu0 %v2377, 96
      %v2614 = vpop.permute.xlu0 %2613
      %v2623 = vsel %vm573, %v2511, %v691
      %2624 = vrot.lane.b32.xlu0 %v2394, 112
      %v2625 = vpop.permute.xlu0 %2624
      %2626 = vrot.lane.b32.xlu0 %v2397, 112
      %v2627 = vpop.permute.xlu0 %2626
      %2628 = vrot.lane.b32.xlu0 %v2399, 112
      %v2629 = vpop.permute.xlu0 %2628
      %2630 = vrot.lane.b32.xlu0 %v2401, 112
      %v2631 = vpop.permute.xlu0 %2630
      %2632 = vrot.lane.b32.xlu0 %v2403, 112
      %v2633 = vpop.permute.xlu0 %2632
      %2634 = vrot.lane.b32.xlu0 %v2405, 112
      %v2635 = vpop.permute.xlu0 %2634
      %2636 = vrot.lane.b32.xlu0 %v2512, 112
      %v2637 = vpop.permute.xlu0 %2636
      %2638 = vrot.lane.b32.xlu0 %v2623, 112
      %v2639 = vpop.permute.xlu0 %2638
      %v2655 = vrot.slane %v2378, 2
      %v2656 = vrot.slane %v2379, 2
      %v2657 = vsel %vm742, %v2655, %v2656
      %v2658 = vrot.slane %v2380, 2
      %v2659 = vsel %vm742, %v2656, %v2658
      %v2660 = vrot.slane %v2381, 2
      %v2661 = vsel %vm742, %v2658, %v2660
      %v2662 = vrot.slane %v2382, 2
      %v2663 = vsel %vm742, %v2660, %v2662
      %v2664 = vrot.slane %v2383, 2
      %v2665 = vsel %vm742, %v2662, %v2664
      %v2666 = vrot.slane %v2384, 2
      %v2667 = vsel %vm742, %v2664, %v2666
      %v2668 = vsel %vm742, %v2666, %v991
      %v2677 = vsel %vm261, %v599, %v2407
      %v2678 = vsel %vm261, %v2339, %v2409
      %v2679 = vsel %vm261, %v2340, %v2411
      %v2680 = vsel %vm261, %v2341, %v2413
      %v2681 = vsel %vm261, %v2342, %v2415
      %v2682 = vsel %vm261, %v2343, %v2417
      %v2683 = vsel %vm261, %v2344, %v2419
      %v2684 = vsel %vm261, %v2345, %v2421
      %v2685 = vsel %vm1012, %v2677, %v2455
      %v2686 = vsel %vm1012, %v2678, %v2457
      %v2687 = vsel %vm1012, %v2679, %v2459
      %v2688 = vsel %vm1012, %v2680, %v2461
      %v2689 = vsel %vm1012, %v2681, %v2463
      %v2690 = vsel %vm1012, %v2682, %v2465
      %v2691 = vsel %vm1012, %v2683, %v2467
      %v2692 = vsel %vm1012, %v2684, %v2469
      %v2693 = vsel %vm1022, %v2685, %v2487
      %v2694 = vsel %vm1022, %v2686, %v2489
      %v2695 = vsel %vm1022, %v2687, %v2491
      %v2696 = vsel %vm1022, %v2688, %v2493
      %v2697 = vsel %vm1022, %v2689, %v2495
      %v2698 = vsel %vm1022, %v2690, %v2497
      %v2699 = vsel %vm1022, %v2691, %v2499
      %v2700 = vsel %vm1022, %v2692, %v2501
      %v2701 = vsel %vm1032, %v1023, %v2514
      %v2702 = vsel %vm1032, %v2693, %v2516
      %v2703 = vsel %vm1032, %v2694, %v2518
      %v2704 = vsel %vm1032, %v2695, %v2520
      %v2705 = vsel %vm1032, %v2696, %v2522
      %v2706 = vsel %vm1032, %v2697, %v2524
      %v2707 = vsel %vm1032, %v2698, %v2526
      %v2708 = vsel %vm1032, %v2699, %v2528
      %v2709 = vsel %vm1032, %v2700, %v2530
      %v2710 = vsel %vm1042, %v2701, %v2565
      %v2711 = vsel %vm1042, %v2702, %v2567
      %v2712 = vsel %vm1042, %v2703, %v2569
      %v2713 = vsel %vm1042, %v2704, %v2571
      %v2714 = vsel %vm1042, %v2705, %v2573
      %v2715 = vsel %vm1042, %v2706, %v2575
      %v2716 = vsel %vm1042, %v2707, %v2577
      %v2717 = vsel %vm1042, %v2708, %v2579
      %v2718 = vsel %vm1042, %v2709, %v2581
      %v2719 = vsel %vm1052, %v2710, %v2600
      %v2720 = vsel %vm1052, %v2711, %v2602
      %v2721 = vsel %vm1052, %v2712, %v2604
      %v2722 = vsel %vm1052, %v2713, %v2606
      %v2723 = vsel %vm1052, %v2714, %v2608
      %v2724 = vsel %vm1052, %v2715, %v2610
      %v2725 = vsel %vm1052, %v2716, %v2612
      %v2726 = vsel %vm1052, %v2717, %v2614
      %v2727 = vsel %vm1052, %v2718, %v932
      %v2728 = vsel %vm1062, %v2719, %v2625
      %v2729 = vsel %vm1062, %v2720, %v2627
      %v2730 = vsel %vm1062, %v2721, %v2629
      %v2731 = vsel %vm1062, %v2722, %v2631
      %v2732 = vsel %vm1062, %v2723, %v2633
      %v2733 = vsel %vm1062, %v2724, %v2635
      %v2734 = vsel %vm1062, %v2725, %v2637
      %v2735 = vsel %vm1062, %v2726, %v2639
      %v2736 = vsel %vm1062, %v2727, %v960
      %v2737 = vpack.c.bf16 %v2729, %v2728
      %v2738 = vpack.c.bf16 %v2657, %v2655
      %v2739 = vpack.c.bf16 %v2731, %v2730
      %v2740 = vpack.c.bf16 %v2661, %v2659
      %v2741 = vpack.c.bf16 %v2733, %v2732
      %v2742 = vpack.c.bf16 %v2665, %v2663
      %v2743 = vpack.c.bf16 %v2735, %v2734
      %v2744 = vpack.c.bf16 %v2668, %v2667
      %v2745 = vpack.c.bf16 %v2736, %v2736
      %s2746 = scalar_lea.vmem %s5, 144
      %v2747 = vld [vmem:[%s2746] sm:$0xf]
      %v2748 = vld [vmem:[%s2746 + $0x4] sm:$0xf]
      %v2749 = vld [vmem:[%s2746 + $0x8] sm:$0xf]
      %v2750 = vld [vmem:[%s2746 + $0xc] sm:$0xf]
      %v2751 = vld [vmem:[%s2746 + $0x10] sm:$0xf]
      %v2752 = vld [vmem:[%s2746 + $0x14] sm:$0xf]
      %v2753 = vld [vmem:[%s2746 + $0x18] sm:$0xf]
      %v2754 = vld [vmem:[%s2746 + $0x1c] sm:$0xf]
      %v2755 = vld [vmem:[%s2746 + $0x20] sm:$0xf]
      %v2756 = vld [vmem:[%s2746 + $0x24] sm:$0xf]
      %v2757 = vld [vmem:[%s2746 + $0x28] sm:$0xf]
      %v2758 = vld [vmem:[%s2746 + $0x2c] sm:$0xf]
      %v2759 = vld [vmem:[%s2746 + $0x30] sm:$0xf]
      %v2760 = vld [vmem:[%s2746 + $0x34] sm:$0xf]
      %v2761 = vld [vmem:[%s2746 + $0x38] sm:$0xf]
      %v2762 = vld [vmem:[%s2746 + $0x3c] sm:$0xf]
      %v2763 = vld [vmem:[%s2746 + $0x40] sm:$0xf]
      %v2764 = vld [vmem:[%s2746 + $0x44] sm:$0xf]
      %v2766 = vshrl.u32 %v2737, 16
      %v2768 = vrot.slane %v2766, 3
      %v2769 = vshll.u32 %v2737, 16
      %v2771 = vrot.slane %v2769, 4
      %v2772 = vor.u32 %v2768, %v2771
      %v2774 = vshrl.u32 %v2739, 16
      %v2776 = vrot.slane %v2774, 3
      %v2777 = vshll.u32 %v2739, 16
      %v2779 = vrot.slane %v2777, 4
      %v2780 = vor.u32 %v2776, %v2779
      %v2781 = vsel %vm1100, %v2772, %v2780
      %v2783 = vshrl.u32 %v2738, 16
      %v2785 = vrot.slane %v2783, 3
      %v2786 = vshll.u32 %v2738, 16
      %v2788 = vrot.slane %v2786, 4
      %v2789 = vor.u32 %v2785, %v2788
      %v2791 = vshrl.u32 %v2740, 16
      %v2793 = vrot.slane %v2791, 3
      %v2794 = vshll.u32 %v2740, 16
      %v2796 = vrot.slane %v2794, 4
      %v2797 = vor.u32 %v2793, %v2796
      %v2798 = vsel %vm1100, %v2789, %v2797
      %v2800 = vshrl.u32 %v2741, 16
      %v2802 = vrot.slane %v2800, 3
      %v2803 = vshll.u32 %v2741, 16
      %v2805 = vrot.slane %v2803, 4
      %v2806 = vor.u32 %v2802, %v2805
      %v2807 = vsel %vm1100, %v2780, %v2806
      %v2809 = vshrl.u32 %v2742, 16
      %v2811 = vrot.slane %v2809, 3
      %v2812 = vshll.u32 %v2742, 16
      %v2814 = vrot.slane %v2812, 4
      %v2815 = vor.u32 %v2811, %v2814
      %v2816 = vsel %vm1100, %v2797, %v2815
      %v2818 = vshrl.u32 %v2743, 16
      %v2820 = vrot.slane %v2818, 3
      %v2821 = vshll.u32 %v2743, 16
      %v2823 = vrot.slane %v2821, 4
      %v2824 = vor.u32 %v2820, %v2823
      %v2825 = vsel %vm1100, %v2806, %v2824
      %v2827 = vshrl.u32 %v2744, 16
      %v2829 = vrot.slane %v2827, 3
      %v2830 = vshll.u32 %v2744, 16
      %v2832 = vrot.slane %v2830, 4
      %v2833 = vor.u32 %v2829, %v2832
      %v2834 = vsel %vm1100, %v2815, %v2833
      %v2836 = vshrl.u32 %v2745, 16
      %v2838 = vrot.slane %v2836, 3
      %v2839 = vshll.u32 %v2745, 16
      %v2841 = vrot.slane %v2839, 4
      %v2842 = vor.u32 %v2838, %v2841
      %v2843 = vsel %vm1100, %v2824, %v2842
      %v2844 = vsel %vm1100, %v2833, %v1187
      %v2867 = vunpack.c.l.b16 %v2747
      %v2868 = vunpack.c.l.b16 %v2748
      %v2869 = vunpack.c.l.b16 %v2749
      %v2870 = vunpack.c.l.b16 %v2750
      %v2871 = vunpack.c.l.b16 %v2751
      %v2872 = vunpack.c.l.b16 %v2752
      %v2873 = vunpack.c.l.b16 %v2753
      %v2874 = vunpack.c.l.b16 %v2754
      %v2875 = vunpack.c.l.b16 %v2755
      %v2876 = vunpack.c.l.b16 %v2756
      %v2877 = vunpack.c.l.b16 %v2757
      %v2878 = vunpack.c.l.b16 %v2758
      %v2879 = vunpack.c.l.b16 %v2759
      %v2880 = vunpack.c.l.b16 %v2760
      %v2881 = vunpack.c.l.b16 %v2761
      %v2882 = vunpack.c.l.b16 %v2762
      %v2883 = vunpack.c.l.b16 %v2763
      %v2884 = vunpack.c.l.b16 %v2764
      %v2885 = vpack.c.b16 %v2868, %v2867
      %v2886 = vpack.c.b16 %v2870, %v2869
      %v2887 = vpack.c.b16 %v2872, %v2871
      %v2888 = vpack.c.b16 %v2874, %v2873
      %v2889 = vpack.c.b16 %v2876, %v2875
      %v2890 = vpack.c.b16 %v2878, %v2877
      %v2891 = vpack.c.b16 %v2880, %v2879
      %v2892 = vpack.c.b16 %v2882, %v2881
      %v2893 = vpack.c.b16 %v2884, %v2883
      %v2904 = vsel %vm261, %v2798, 0
      %v2907 = vsel %vm261, %v2816, 0
      %v2910 = vsel %vm261, %v2834, 0
      %v2913 = vsel %vm261, %v2844, 0
      %2915 = vmatpush.bf16.msra.mxu0 %v2892
      %2916 = vmatpush.bf16.msra.mxu0 %v2891
      %2917 = vmatpush.bf16.msra.mxu0 %v2890
      %2918 = vmatpush.bf16.msra.mxu0 %v2889
      %2919 = vmatpush.bf16.msra.mxu0 %v2888
      %2920 = vmatpush.bf16.msra.mxu0 %v2887
      %2921 = vmatpush.bf16.msra.mxu0 %v2886
      %2922 = vmatpush.bf16.msra.mxu0 %v2885
      %2923 = vmatmul.bf16.gmra.mxu0 %v2781
      %v2924 = vpop.f32.mrf.mxu0
      %v2925 = vadd.f32 0.0, %v2924
      %v2926 = vpop.f32.mrf.mxu0
      %v2927 = vadd.f32 0.0, %v2926
      %2928 = vmatmul.bf16.gmra.mxu0 %v2807
      %v2929 = vpop.f32.mrf.mxu0
      %v2930 = vadd.f32 0.0, %v2929
      %v2931 = vpop.f32.mrf.mxu0
      %v2932 = vadd.f32 0.0, %v2931
      %2933 = vmatmul.bf16.gmra.mxu0 %v2825
      %v2934 = vpop.f32.mrf.mxu0
      %v2935 = vadd.f32 0.0, %v2934
      %v2936 = vpop.f32.mrf.mxu0
      %v2937 = vadd.f32 0.0, %v2936
      %2938 = vmatmul.bf16.gmra.mxu0 %v2843
      %v2939 = vpop.f32.mrf.mxu0
      %v2940 = vadd.f32 0.0, %v2939
      %v2941 = vpop.f32.mrf.mxu0
      %v2942 = vadd.f32 0.0, %v2941
      %2943 = vdwg.mxu0
      %2944 = vmatpush.bf16.msra.mxu0 0
      %2945 = vmatpush.bf16.msra.mxu0 0
      %2946 = vmatpush.bf16.msra.mxu0 0
      %2947 = vmatpush.bf16.msra.mxu0 0
      %2948 = vmatpush.bf16.msra.mxu0 0
      %2949 = vmatpush.bf16.msra.mxu0 0
      %2950 = vmatpush.bf16.msra.mxu0 0
      %2951 = vmatpush.bf16.msra.mxu0 %v2893
      %2952 = vmatmul.bf16.gmra.mxu0 %v2904
      %v2953 = vpop.f32.mrf.mxu0
      %v2954 = vadd.f32 %v2925, %v2953
      %v2955 = vpop.f32.mrf.mxu0
      %v2956 = vadd.f32 %v2927, %v2955
      %2957 = vmatmul.bf16.gmra.mxu0 %v2907
      %v2958 = vpop.f32.mrf.mxu0
      %v2959 = vadd.f32 %v2930, %v2958
      %v2960 = vpop.f32.mrf.mxu0
      %v2961 = vadd.f32 %v2932, %v2960
      %2962 = vmatmul.bf16.gmra.mxu0 %v2910
      %v2963 = vpop.f32.mrf.mxu0
      %v2964 = vadd.f32 %v2935, %v2963
      %v2965 = vpop.f32.mrf.mxu0
      %v2966 = vadd.f32 %v2937, %v2965
      %2967 = vmatmul.bf16.gmra.mxu0 %v2913
      %v2968 = vpop.f32.mrf.mxu0
      %v2969 = vadd.f32 %v2940, %v2968
      %v2970 = vpop.f32.mrf.mxu0
      %v2971 = vadd.f32 %v2942, %v2970
      %2972 = vdwg.mxu0
      %2981 = vrot.lane.b32.xlu0 %v2954, 32
      %v2982 = vpop.permute.xlu0 %2981
      %2983 = vrot.lane.b32.xlu0 %v2956, 32
      %v2984 = vpop.permute.xlu0 %2983
      %2985 = vrot.lane.b32.xlu0 %v2959, 32
      %v2986 = vpop.permute.xlu0 %2985
      %2987 = vrot.lane.b32.xlu0 %v2961, 32
      %v2988 = vpop.permute.xlu0 %2987
      %2989 = vrot.lane.b32.xlu0 %v2964, 32
      %v2990 = vpop.permute.xlu0 %2989
      %2991 = vrot.lane.b32.xlu0 %v2966, 32
      %v2992 = vpop.permute.xlu0 %2991
      %2993 = vrot.lane.b32.xlu0 %v2969, 32
      %v2994 = vpop.permute.xlu0 %2993
      %2995 = vrot.lane.b32.xlu0 %v2971, 32
      %v2996 = vpop.permute.xlu0 %2995
      %vm3005 = vcmask 326912
      %3006 = vst.msk [vmem:[%s251] sm:$0xff] %vm3005, %v2982
      %3007 = vst.msk [vmem:[%s251 + $0x8] sm:$0xff] %vm3005, %v2984
      %3008 = vst.msk [vmem:[%s251 + $0x10] sm:$0xff] %vm3005, %v2986
      %3009 = vst.msk [vmem:[%s251 + $0x18] sm:$0xff] %vm3005, %v2988
      %3010 = vst.msk [vmem:[%s251 + $0x20] sm:$0xff] %vm3005, %v2990
      %3011 = vst.msk [vmem:[%s251 + $0x28] sm:$0xff] %vm3005, %v2992
      %3012 = vst.msk [vmem:[%s251 + $0x30] sm:$0xff] %vm3005, %v2994
      %3013 = vst.msk [vmem:[%s251 + $0x38] sm:$0xff] %vm3005, %v2996
      %p3014 = scmp.lt.s32.totalorder %s17, 1
      %s3015 = scalar_select %p3014, %s17, 1
      %s3016 = smul.addr %s3015, 8
      %s3017 = smul.addr %s3016, 8
      %s3018 = scalar_lea.vmem %s6, %s3017
      // Predicated region
      $region45: #{dense_block_forward.1} parent=43 // pred_check
        %p3019 = pneg %p166
      $region46: #{dense_block_forward.1} parent=43 // pred_check_branch
        %3021 = sbr.rel (%p3019) target = $region48
      $region47: #{dense_block_forward.1} parent=43 // pred_region
        _
      $region48: #{dense_block_forward.1} parent=43 // pred_fallthru
        _
    $region44: #{dense_block_forward.1} parent=5 // pred_fallthru
      _
    %p3022 = scmp.le.s32.totalorder 2, %s12
    // Predicated region
    $region49: #{dense_block_forward.1} parent=5 // pred_check
      %p3023 = pneg %p3022
    $region50: #{dense_block_forward.1} parent=5 // pred_check_branch
      %3025 = sbr.rel (%p3023) target = $region52
    $region51: #{dense_block_forward.1} parent=5 // pred_region
      %s3026 = ssub.s32 %s12, 2
      // Predicated region
      $region53: #{dense_block_forward.1} parent=51 // pred_check
        %p3027 = pneg %p172
      $region54: #{dense_block_forward.1} parent=51 // pred_check_branch
        %3029 = sbr.rel (%p3027) target = $region56
      $region55: #{dense_block_forward.1} parent=51 // pred_region
        %p3030 = scmp.lt.s32.totalorder %s18, 1
        %s3031 = scalar_select %p3030, %s18, 1
        %s3032 = smul.addr %s3031, 8
        %s3033 = smul.addr %s3032, 8
        %s3034 = scalar_lea.vmem %s6, %s3033
      $region56: #{dense_block_forward.1} parent=51 // pred_fallthru
        _
    $region52: #{dense_block_forward.1} parent=5 // pred_fallthru
      _
  $region6: #{dense_block_forward.1} parent=0 // loop_footer
    %s16 = sadd.s32 1, %s12
  $region7: #{dense_block_forward.1} parent=0 // loop_footer_branch
    %11 = sbr.rel target = $region3
  $region8: #{dense_block_forward.1} parent=0 // loop_exit
    _

</llo_original>
